<compile_context>
chip_gen: v5e
topology: v5e:2x2
jax: 0.10.0
libtpu: 0.0.40
codegen_flags: <defaults>
</compile_context>

<pallas_src>
import jax
import jax.numpy as jnp
from jax import lax
from jax.experimental import pallas as pl
from jax.experimental.pallas import tpu as pltpu

# One-shot projections (x@W_ih, h@W_out, h_n@W_hid) run in bf16 (MXU native).
MATMUL_DTYPE = jnp.bfloat16
# The recurrent matmul h_prev @ W_hh stays f32 so error does not compound through time.
# TODO(synk): switch to bf16 (and/or tile W_hh) for very large H under v7x's 64 MiB VMEM.
RECUR_MATMUL_DTYPE = jnp.float32


# ---------------------------------------------------------------------------
# VMEM sizing helpers (per-generation: v5e/v6e 128 MiB, v7x 64 MiB per TC).
# ---------------------------------------------------------------------------
def _vmem_capacity_bytes():
    try:
        info = pltpu.get_tpu_info()
        for attr in ("vmem_capacity_bytes", "vmem_size_bytes", "vmem_bytes"):
            v = getattr(info, attr, None)
            if v:
                return int(v)
    except Exception:
        pass
    return 64 * 1024 * 1024          # conservative fallback (v7x per-TC physical)


def _vmem_limit_bytes():
    # ~85% of physical, capped at 120 MiB; always leave compiler/internal headroom.
    cap = _vmem_capacity_bytes()
    return int(max(32 * 1024 * 1024, min(int(cap * 0.85), 120 * 1024 * 1024)))


# ---------------------------------------------------------------------------
# Tiled dense kernel: y = x @ w + b   (M, N gridded and "parallel", full K per block).
# ---------------------------------------------------------------------------
def _dense_kernel(x_ref, w_ref, b_ref, o_ref):
    # x/w are already cast to MATMUL_DTYPE in the wrapper (halves activation DMA);
    # accumulate in f32 on the MXU, add bias, cast to the requested output dtype.
    o_ref[...] = (jnp.dot(x_ref[...], w_ref[...],
                          preferred_element_type=jnp.float32)
                  + b_ref[...]).astype(o_ref.dtype)


def _dense(x, w, b, out_dtype=jnp.float32, tile_m=256, tile_n=512):
    """x:(M,K), w:(K,N), b:(1,N) -> (M,N) in out_dtype.

    Grid over (M, N), both marked "parallel" (v7x megacore splits them). K is kept
    whole per block, which fits comfortably for encoder-sized ninp/nhid.
    TODO(synk): add a K reduction axis + f32 accumulator for very large K.
    """
    M, K = x.shape
    N = w.shape[1]
    tm = M if M <= tile_m else tile_m          # tile_m multiple of 8, else full M
    tn = N if N <= tile_n else tile_n          # tile_n multiple of 128, else full N
    grid = (pl.cdiv(M, tm), pl.cdiv(N, tn))
    cost = pl.CostEstimate(
        flops=2 * M * N * K,
        transcendentals=0,
        bytes_accessed=int(M * K * x.dtype.itemsize + K * N * w.dtype.itemsize
                           + M * N * jnp.dtype(out_dtype).itemsize),
    )
    return pl.pallas_call(
        _dense_kernel,
        out_shape=jax.ShapeDtypeStruct((M, N), out_dtype),
        grid_spec=pltpu.PrefetchScalarGridSpec(
            num_scalar_prefetch=0,
            grid=grid,
            in_specs=[
                pl.BlockSpec((tm, K), lambda i, j: (i, 0)),
                pl.BlockSpec((K, tn), lambda i, j: (0, j)),
                pl.BlockSpec((1, tn), lambda i, j: (0, j)),
            ],
            out_specs=pl.BlockSpec((tm, tn), lambda i, j: (i, j)),
        ),
        compiler_params=pltpu.CompilerParams(
            dimension_semantics=("parallel", "parallel"),
            vmem_limit_bytes=_vmem_limit_bytes(),
        ),
        cost_estimate=cost,
    )(x, w, b)


# ---------------------------------------------------------------------------
# Serial GRU recurrence kernel with fused out_linear epilogue.
# ---------------------------------------------------------------------------
def _make_gru_kernel(S, Tb, H, nout, needs_mask):
    def kernel(gi_ref, whh_ref, bhh_ref, wout_ref, bout_ref,
               out_ref, hn_ref, h_scr):
        @pl.when(pl.program_id(0) == 0)
        def _init():
            h_scr[...] = jnp.zeros_like(h_scr)

        B = h_scr.shape[0]
        whh = whh_ref[...]                               # (H, 3H)  loop-invariant
        wout = wout_ref[...]                             # (H, nout) loop-invariant
        # Hoist bias broadcasts out of the unrolled loop (JAX does not CSE
        # broadcast_in_dim, so per-step broadcasts would be emitted Tb times).
        bhh_b = jnp.broadcast_to(bhh_ref[...], (B, 3 * H))
        bout_b = jnp.broadcast_to(bout_ref[...], (B, nout))
        t0 = pl.program_id(0) * Tb

        def step(i, h_prev):
            gi = gi_ref[i].astype(jnp.float32)           # (B, 3H): bf16 slab -> f32
            gh = jnp.dot(h_prev, whh,
                         preferred_element_type=jnp.float32) + bhh_b
            # PyTorch gate order [r, z, n]; lane-aligned slices when H % 128 == 0.
            r = jax.nn.sigmoid(gi[:, 0:H] + gh[:, 0:H])
            z = jax.nn.sigmoid(gi[:, H:2 * H] + gh[:, H:2 * H])
            n = jnp.tanh(gi[:, 2 * H:] + r * gh[:, 2 * H:])
            h_new = n + z * (h_prev - n)                 # == (1-z)*n + z*h_prev
            if needs_mask:                               # ragged tail block only
                h_new = jnp.where(t0 + i < S, h_new, h_prev)
            # Fused out_linear: project & store directly (no hseq HBM round-trip).
            out_ref[i] = (jnp.dot(h_new.astype(wout.dtype), wout,
                                  preferred_element_type=jnp.float32) + bout_b)
            return h_new

        h_last = lax.fori_loop(0, Tb, step, h_scr[...], unroll=True)
        h_scr[...] = h_last
        hn_ref[...] = h_last
    return kernel


def _pick_time_block(S, B, H, nout, vmem_limit, max_block=32):
    """Largest Tb whose double-buffered blocks fit the VMEM budget."""
    bf16, f32 = 2, 4
    fixed = (H * 3 * H * jnp.dtype(RECUR_MATMUL_DTYPE).itemsize   # whh (Buffered(1))
             + H * nout * bf16                                    # wout (Buffered(1))
             + (3 * H + nout) * f32                               # biases
             + 3 * B * H * f32)                                   # h scratch + h_n out
    slack = 2 * 1024 * 1024
    per_step = B * (2 * 3 * H * bf16      # gi block, bf16, double-buffered
                    + 2 * nout * f32)     # out block, f32, double-buffered
    budget = vmem_limit - fixed - slack
    tb = budget // per_step if budget > 0 else 1
    return int(max(1, min(tb, max_block, S)))


def encoder_rnn_forward(inputs, params, *, time_block=None):
    """inputs: (S, B, ninp) f32 -> (output (S, B, nout), hidden (1, B, nout)).

    Best utilisation when H is a multiple of 128 and B a multiple of 16 (bf16
    sublanes); smaller shapes remain correct (blocks fall back to full dims).
    """
    S, B, ninp = inputs.shape
    H = params["whh_t"].shape[0]
    nout = params["wout_t"].shape[1]
    mdt = MATMUL_DTYPE
    vmem_limit = _vmem_limit_bytes()

    # -- 1) Hoisted input projection: one tiled, megacore-parallel matmul; bf16
    #       activations in, bf16 gi slab out (halves HBM traffic into the GRU).
    # TODO(synk): for very small B / HBM-bound cases, fuse this matmul into the
    # recurrence kernel per Tb block instead of materialising gi at all.
    gi = _dense(inputs.reshape(S * B, ninp).astype(mdt),
                params["wih_t"].astype(mdt),
                params["bih"],
                out_dtype=mdt).reshape(S, B, 3 * H)

    # -- 2) Serial GRU recurrence (+ fused out_linear) over Tb-timestep blocks.
    Tb = time_block if time_block is not None else _pick_time_block(
        S, B, H, nout, vmem_limit)
    n_blocks = pl.cdiv(S, Tb)
    needs_mask = (S % Tb) != 0
    inv = pl.Buffered(1)          # loop-invariant operands: do not double-buffer

    out, h_n = pl.pallas_call(
        _make_gru_kernel(S=S, Tb=Tb, H=H, nout=nout, needs_mask=needs_mask),
        out_shape=(jax.ShapeDtypeStruct((S, B, nout), jnp.float32),
                   jax.ShapeDtypeStruct((B, H), jnp.float32)),
        grid_spec=pltpu.PrefetchScalarGridSpec(
            num_scalar_prefetch=0,
            grid=(n_blocks,),
            in_specs=[
                pl.BlockSpec((Tb, B, 3 * H), lambda t: (t, 0, 0)),
                pl.BlockSpec((H, 3 * H), lambda t: (0, 0), pipeline_mode=inv),
                pl.BlockSpec((1, 3 * H), lambda t: (0, 0), pipeline_mode=inv),
                pl.BlockSpec((H, nout), lambda t: (0, 0), pipeline_mode=inv),
                pl.BlockSpec((1, nout), lambda t: (0, 0), pipeline_mode=inv),
            ],
            out_specs=(
                pl.BlockSpec((Tb, B, nout), lambda t: (t, 0, 0)),
                pl.BlockSpec((B, H), lambda t: (0, 0)),
            ),
            scratch_shapes=[pltpu.VMEM((B, H), jnp.float32)],
        ),
        compiler_params=pltpu.CompilerParams(
            dimension_semantics=("arbitrary",),            # time axis is serial
            vmem_limit_bytes=vmem_limit,
        ),
    )(gi,
      params["whh_t"].astype(RECUR_MATMUL_DTYPE),
      params["bhh"],
      params["wout_t"].astype(mdt),
      params["bout"])

    # -- 3) hid_linear on h_n only (runs exactly once).
    hid = _dense(h_n.astype(mdt), params["whid_t"].astype(mdt), params["bhid"],
                 out_dtype=jnp.float32)[None, :, :]
    return out, hid


# ---------------------------------------------------------------------------
# Parameter init (PyTorch GRU/Linear shapes) and pure-f32 JAX reference.
# ---------------------------------------------------------------------------
def init_params(key, ninp, nhid, nout):
    ks = jax.random.split(key, 8)
    k_gru = 1.0 / jnp.sqrt(nhid)
    u = lambda k, shape, bound: jax.random.uniform(k, shape, jnp.float32, -bound, bound)
    w_ih = u(ks[0], (3 * nhid, ninp), k_gru)   # torch weight_ih_l0: (3H, ninp)
    w_hh = u(ks[1], (3 * nhid, nhid), k_gru)   # torch weight_hh_l0: (3H, H)
    b_ih = u(ks[2], (3 * nhid,), k_gru)
    b_hh = u(ks[3], (3 * nhid,), k_gru)
    k_lin = 1.0 / jnp.sqrt(nhid)
    w_out = u(ks[4], (nout, nhid), k_lin)
    b_out = u(ks[5], (nout,), k_lin)
    w_hid = u(ks[6], (nout, nhid), k_lin)
    b_hid = u(ks[7], (nout,), k_lin)
    return {
        "wih_t": w_ih.T, "whh_t": w_hh.T,
        "bih": b_ih[None, :], "bhh": b_hh[None, :],
        "wout_t": w_out.T, "bout": b_out[None, :],
        "whid_t": w_hid.T, "bhid": b_hid[None, :],
    }


def encoder_rnn_ref(inputs, params):
    """Pure-f32 lax.scan GRU reference (true PyTorch semantics, no bf16 mirroring)."""
    S, B, ninp = inputs.shape
    H = params["whh_t"].shape[0]

    def cell(h, x):
        gi = x @ params["wih_t"] + params["bih"]
        gh = h @ params["whh_t"] + params["bhh"]
        r = jax.nn.sigmoid(gi[:, 0:H] + gh[:, 0:H])
        z = jax.nn.sigmoid(gi[:, H:2 * H] + gh[:, H:2 * H])
        n = jnp.tanh(gi[:, 2 * H:] + r * gh[:, 2 * H:])
        h = (1.0 - z) * n + z * h
        return h, h

    h0 = jnp.zeros((B, H), jnp.float32)
    h_n, hs = lax.scan(cell, h0, inputs)
    out = hs @ params["wout_t"] + params["bout"]
    hid = (h_n @ params["whid_t"] + params["bhid"])[None, :, :]
    return out, hid


if __name__ == "__main__":
    seq_len, batch, ninp, nhid, nout = 8, 2, 16, 32, 16
    key = jax.random.PRNGKey(0)
    k_x, k_p = jax.random.split(key)
    x = jax.random.normal(k_x, (seq_len, batch, ninp), jnp.float32)
    params = init_params(k_p, ninp, nhid, nout)

    out_ref, hid_ref = encoder_rnn_ref(x, params)

    # bf16 input/output projections vs a pure-f32 reference -> loose-ish tolerance.
    atol = rtol = 3e-2

    fwd = jax.jit(encoder_rnn_forward)
    out, hid = fwd(x, params)
    out = jax.block_until_ready(out)
    hid = jax.block_until_ready(hid)
    assert out.shape == (seq_len, batch, nout)
    assert hid.shape == (1, batch, nout)
    assert jnp.allclose(out, out_ref, atol=atol, rtol=rtol), \
        float(jnp.max(jnp.abs(out - out_ref)))
    assert jnp.allclose(hid, hid_ref, atol=atol, rtol=rtol), \
        float(jnp.max(jnp.abs(hid - hid_ref)))

    # Also exercise the multi-block + ragged-tail (S % Tb != 0) masked path.
    fwd_rag = jax.jit(lambda xx, pp: encoder_rnn_forward(xx, pp, time_block=3))
    out3, hid3 = fwd_rag(x, params)
    out3 = jax.block_until_ready(out3)
    hid3 = jax.block_until_ready(hid3)
    assert jnp.allclose(out3, out_ref, atol=atol, rtol=rtol), \
        float(jnp.max(jnp.abs(out3 - out_ref)))
    assert jnp.allclose(hid3, hid_ref, atol=atol, rtol=rtol), \
        float(jnp.max(jnp.abs(hid3 - hid_ref)))

    print("KERNEL_OK")
</pallas_src>

<mosaic_0001>
module attributes {stable_mosaic.version = 11 : i64} {
  func.func @_dense_kernel(%arg0: i32, %arg1: i32, %arg2: memref<16x16xbf16, #tpu.memory_space<vmem>>, %arg3: memref<16x96xbf16, #tpu.memory_space<vmem>>, %arg4: memref<1x96xf32, #tpu.memory_space<vmem>>, %arg5: memref<16x96xbf16, #tpu.memory_space<vmem>>) attributes {dimension_semantics = [#tpu.dimension_semantics<parallel>, #tpu.dimension_semantics<parallel>], iteration_bounds = array<i64: 1, 1>, scalar_prefetch = 0 : i64, scratch_operands = 0 : i64, tpu.core_type = #tpu.core_type<tc>, window_params = [{transform_indices = @transform_0, window_bounds = array<i64: 16, 16>}, {transform_indices = @transform_1, window_bounds = array<i64: 16, 96>}, {transform_indices = @transform_2, window_bounds = array<i64: 1, 96>}, {transform_indices = @transform_3, window_bounds = array<i64: 16, 96>}]} {
    %c0 = arith.constant 0 : index
    %c0_0 = arith.constant 0 : index
    %0 = vector.load %arg2[%c0, %c0_0] : memref<16x16xbf16, #tpu.memory_space<vmem>>, vector<16x16xbf16>
    %c0_1 = arith.constant 0 : index
    %c0_2 = arith.constant 0 : index
    %1 = vector.load %arg3[%c0_1, %c0_2] : memref<16x96xbf16, #tpu.memory_space<vmem>>, vector<16x96xbf16>
    %cst = arith.constant dense<0.000000e+00> : vector<16x96xf32>
    %2 = tpu.matmul %0, %1, %cst {dimension_numbers = #tpu.dot_dimension_numbers<[1], [0], [0], [1], [0, 0, 1, 1], [], []>} : vector<16x16xbf16>, vector<16x96xbf16>, vector<16x96xf32> -> vector<16x96xf32>
    %c0_3 = arith.constant 0 : index
    %c0_4 = arith.constant 0 : index
    %3 = vector.load %arg4[%c0_3, %c0_4] : memref<1x96xf32, #tpu.memory_space<vmem>>, vector<1x96xf32>
    %4 = vector.broadcast %3 : vector<1x96xf32> to vector<16x96xf32>
    %5 = arith.addf %2, %4 : vector<16x96xf32>
    %6 = arith.truncf %5 : vector<16x96xf32> to vector<16x96xbf16>
    %c0_5 = arith.constant 0 : index
    %c0_6 = arith.constant 0 : index
    %7 = vector.load %arg5[%c0_5, %c0_6] : memref<16x96xbf16, #tpu.memory_space<vmem>>, vector<16x96xbf16>
    tpu.vector_store %arg5[%c0_5, %c0_6], %6 {strides = array<i32>} : memref<16x96xbf16, #tpu.memory_space<vmem>>, vector<16x96xbf16>,
    return
  }
  func.func @transform_0(%arg0: i32, %arg1: i32) -> (i32, i32) {
    %c0_i32 = arith.constant 0 : i32
    %c0_i32_0 = arith.constant 0 : i32
    return %arg0, %c0_i32 : i32, i32
  }
  func.func @transform_1(%arg0: i32, %arg1: i32) -> (i32, i32) {
    %c0_i32 = arith.constant 0 : i32
    %c0_i32_0 = arith.constant 0 : i32
    return %c0_i32, %arg1 : i32, i32
  }
  func.func @transform_2(%arg0: i32, %arg1: i32) -> (i32, i32) {
    %c0_i32 = arith.constant 0 : i32
    %c0_i32_0 = arith.constant 0 : i32
    return %c0_i32, %arg1 : i32, i32
  }
  func.func @transform_3(%arg0: i32, %arg1: i32) -> (i32, i32) {
    %c0_i32 = arith.constant 0 : i32
    return %arg0, %arg1 : i32, i32
  }
}

module attributes {stable_mosaic.version = 11 : i64} {
  func.func @kernel(%arg0: i32, %arg1: memref<8x2x96xbf16, #tpu.memory_space<vmem>>, %arg2: memref<32x96xf32, #tpu.memory_space<vmem>>, %arg3: memref<1x96xf32, #tpu.memory_space<vmem>>, %arg4: memref<32x16xbf16, #tpu.memory_space<vmem>>, %arg5: memref<1x16xf32, #tpu.memory_space<vmem>>, %arg6: memref<8x2x16xf32, #tpu.memory_space<vmem>>, %arg7: memref<2x32xf32, #tpu.memory_space<vmem>>, %arg8: memref<2x32xf32, #tpu.memory_space<vmem>>) attributes {dimension_semantics = [#tpu.dimension_semantics<arbitrary>], iteration_bounds = array<i64: 1>, scalar_prefetch = 0 : i64, scratch_operands = 1 : i64, tpu.core_type = #tpu.core_type<tc>, window_params = [{transform_indices = @transform_0, window_bounds = array<i64: 8, 2, 96>}, {pipeline_mode = #tpu.pipeline_mode<synchronous>, transform_indices = @transform_1, window_bounds = array<i64: 32, 96>}, {pipeline_mode = #tpu.pipeline_mode<synchronous>, transform_indices = @transform_2, window_bounds = array<i64: 1, 96>}, {pipeline_mode = #tpu.pipeline_mode<synchronous>, transform_indices = @transform_3, window_bounds = array<i64: 32, 16>}, {pipeline_mode = #tpu.pipeline_mode<synchronous>, transform_indices = @transform_4, window_bounds = array<i64: 1, 16>}, {transform_indices = @transform_5, window_bounds = array<i64: 8, 2, 16>}, {pipeline_mode = #tpu.pipeline_mode<synchronous>, transform_indices = @transform_6, window_bounds = array<i64: 2, 32>}]} {
    %c0_i32 = arith.constant 0 : i32
    %0 = arith.cmpi eq, %arg0, %c0_i32 : i32
    %1 = arith.extui %0 : i1 to i32
    %c0_i32_0 = arith.constant 0 : i32
    %2 = arith.cmpi ne, %1, %c0_i32_0 : i32
    scf.if %2 {
      %cst_78 = arith.constant 0.000000e+00 : f32
      %310 = vector.broadcast %cst_78 : f32 to vector<2x32xf32>
      %c0_79 = arith.constant 0 : index
      %c0_80 = arith.constant 0 : index
      %311 = vector.load %arg8[%c0_79, %c0_80] : memref<2x32xf32, #tpu.memory_space<vmem>>, vector<2x32xf32>
      tpu.vector_store %arg8[%c0_79, %c0_80], %310 {strides = array<i32>} : memref<2x32xf32, #tpu.memory_space<vmem>>, vector<2x32xf32>,
    } else {
    }
    %c0 = arith.constant 0 : index
    %c0_1 = arith.constant 0 : index
    %3 = vector.load %arg2[%c0, %c0_1] : memref<32x96xf32, #tpu.memory_space<vmem>>, vector<32x96xf32>
    %c0_2 = arith.constant 0 : index
    %c0_3 = arith.constant 0 : index
    %4 = vector.load %arg4[%c0_2, %c0_3] : memref<32x16xbf16, #tpu.memory_space<vmem>>, vector<32x16xbf16>
    %c0_4 = arith.constant 0 : index
    %c0_5 = arith.constant 0 : index
    %5 = vector.load %arg3[%c0_4, %c0_5] : memref<1x96xf32, #tpu.memory_space<vmem>>, vector<1x96xf32>
    %6 = vector.shape_cast %5 : vector<1x96xf32> to vector<1x96xf32>
    %7 = vector.broadcast %6 : vector<1x96xf32> to vector<2x96xf32>
    %c0_6 = arith.constant 0 : index
    %c0_7 = arith.constant 0 : index
    %8 = vector.load %arg5[%c0_6, %c0_7] : memref<1x16xf32, #tpu.memory_space<vmem>>, vector<1x16xf32>
    %9 = vector.shape_cast %8 : vector<1x16xf32> to vector<1x16xf32>
    %10 = vector.broadcast %9 : vector<1x16xf32> to vector<2x16xf32>
    %c0_8 = arith.constant 0 : index
    %c0_9 = arith.constant 0 : index
    %11 = vector.load %arg8[%c0_8, %c0_9] : memref<2x32xf32, #tpu.memory_space<vmem>>, vector<2x32xf32>
    %c0_i32_10 = arith.constant 0 : i32
    %12 = arith.index_cast %c0_i32_10 : i32 to index
    %c0_11 = arith.constant 0 : index
    %c0_12 = arith.constant 0 : index
    %13 = vector.load %arg1[%12, %c0_11, %c0_12] : memref<8x2x96xbf16, #tpu.memory_space<vmem>>, vector<1x2x96xbf16>
    %14 = vector.shape_cast %13 : vector<1x2x96xbf16> to vector<2x96xbf16>
    %15 = arith.extf %14 : vector<2x96xbf16> to vector<2x96xf32>
    %cst = arith.constant dense<0.000000e+00> : vector<2x96xf32>
    %16 = tpu.matmul %11, %3, %cst {dimension_numbers = #tpu.dot_dimension_numbers<[1], [0], [0], [1], [0, 0, 1, 1], [], []>} : vector<2x32xf32>, vector<32x96xf32>, vector<2x96xf32> -> vector<2x96xf32>
    %17 = arith.addf %16, %7 : vector<2x96xf32>
    %18 = vector.extract_strided_slice %15 {offsets = [0, 0], sizes = [2, 32], strides = [1, 1]} : vector<2x96xf32> to vector<2x32xf32>
    %19 = vector.extract_strided_slice %17 {offsets = [0, 0], sizes = [2, 32], strides = [1, 1]} : vector<2x96xf32> to vector<2x32xf32>
    %20 = arith.addf %18, %19 : vector<2x32xf32>
    %21 = arith.negf %20 : vector<2x32xf32>
    %22 = math.exp %21 : vector<2x32xf32>
    %cst_13 = arith.constant 1.000000e+00 : f32
    %23 = vector.broadcast %cst_13 : f32 to vector<2x32xf32>
    %24 = arith.addf %23, %22 : vector<2x32xf32>
    %25 = arith.divf %23, %24 : vector<2x32xf32>
    %26 = vector.extract_strided_slice %15 {offsets = [0, 32], sizes = [2, 32], strides = [1, 1]} : vector<2x96xf32> to vector<2x32xf32>
    %27 = vector.extract_strided_slice %17 {offsets = [0, 32], sizes = [2, 32], strides = [1, 1]} : vector<2x96xf32> to vector<2x32xf32>
    %28 = arith.addf %26, %27 : vector<2x32xf32>
    %29 = arith.negf %28 : vector<2x32xf32>
    %30 = math.exp %29 : vector<2x32xf32>
    %cst_14 = arith.constant 1.000000e+00 : f32
    %31 = vector.broadcast %cst_14 : f32 to vector<2x32xf32>
    %32 = arith.addf %31, %30 : vector<2x32xf32>
    %33 = arith.divf %31, %32 : vector<2x32xf32>
    %34 = vector.extract_strided_slice %15 {offsets = [0, 64], sizes = [2, 32], strides = [1, 1]} : vector<2x96xf32> to vector<2x32xf32>
    %35 = vector.extract_strided_slice %17 {offsets = [0, 64], sizes = [2, 32], strides = [1, 1]} : vector<2x96xf32> to vector<2x32xf32>
    %36 = arith.mulf %25, %35 : vector<2x32xf32>
    %37 = arith.addf %34, %36 : vector<2x32xf32>
    %38 = math.tanh %37 : vector<2x32xf32>
    %39 = arith.subf %11, %38 : vector<2x32xf32>
    %40 = arith.mulf %33, %39 : vector<2x32xf32>
    %41 = arith.addf %38, %40 : vector<2x32xf32>
    %42 = arith.truncf %41 : vector<2x32xf32> to vector<2x32xbf16>
    %cst_15 = arith.constant dense<0.000000e+00> : vector<2x16xf32>
    %43 = tpu.matmul %42, %4, %cst_15 {dimension_numbers = #tpu.dot_dimension_numbers<[1], [0], [0], [1], [0, 0, 1, 1], [], []>} : vector<2x32xbf16>, vector<32x16xbf16>, vector<2x16xf32> -> vector<2x16xf32>
    %44 = arith.addf %43, %10 : vector<2x16xf32>
    %45 = arith.index_cast %c0_i32_10 : i32 to index
    %c0_16 = arith.constant 0 : index
    %c0_17 = arith.constant 0 : index
    %46 = vector.load %arg6[%45, %c0_16, %c0_17] : memref<8x2x16xf32, #tpu.memory_space<vmem>>, vector<1x2x16xf32>
    %47 = vector.shape_cast %46 : vector<1x2x16xf32> to vector<2x16xf32>
    %48 = vector.shape_cast %44 : vector<2x16xf32> to vector<1x2x16xf32>
    tpu.vector_store %arg6[%45, %c0_16, %c0_17], %48 {strides = array<i32>} : memref<8x2x16xf32, #tpu.memory_space<vmem>>, vector<1x2x16xf32>,
    %c1_i32 = arith.constant 1 : i32
    %49 = arith.index_cast %c1_i32 : i32 to index
    %c0_18 = arith.constant 0 : index
    %c0_19 = arith.constant 0 : index
    %50 = vector.load %arg1[%49, %c0_18, %c0_19] : memref<8x2x96xbf16, #tpu.memory_space<vmem>>, vector<1x2x96xbf16>
    %51 = vector.shape_cast %50 : vector<1x2x96xbf16> to vector<2x96xbf16>
    %52 = arith.extf %51 : vector<2x96xbf16> to vector<2x96xf32>
    %cst_20 = arith.constant dense<0.000000e+00> : vector<2x96xf32>
    %53 = tpu.matmul %41, %3, %cst_20 {dimension_numbers = #tpu.dot_dimension_numbers<[1], [0], [0], [1], [0, 0, 1, 1], [], []>} : vector<2x32xf32>, vector<32x96xf32>, vector<2x96xf32> -> vector<2x96xf32>
    %54 = arith.addf %53, %7 : vector<2x96xf32>
    %55 = vector.extract_strided_slice %52 {offsets = [0, 0], sizes = [2, 32], strides = [1, 1]} : vector<2x96xf32> to vector<2x32xf32>
    %56 = vector.extract_strided_slice %54 {offsets = [0, 0], sizes = [2, 32], strides = [1, 1]} : vector<2x96xf32> to vector<2x32xf32>
    %57 = arith.addf %55, %56 : vector<2x32xf32>
    %58 = arith.negf %57 : vector<2x32xf32>
    %59 = math.exp %58 : vector<2x32xf32>
    %cst_21 = arith.constant 1.000000e+00 : f32
    %60 = vector.broadcast %cst_21 : f32 to vector<2x32xf32>
    %61 = arith.addf %60, %59 : vector<2x32xf32>
    %62 = arith.divf %60, %61 : vector<2x32xf32>
    %63 = vector.extract_strided_slice %52 {offsets = [0, 32], sizes = [2, 32], strides = [1, 1]} : vector<2x96xf32> to vector<2x32xf32>
    %64 = vector.extract_strided_slice %54 {offsets = [0, 32], sizes = [2, 32], strides = [1, 1]} : vector<2x96xf32> to vector<2x32xf32>
    %65 = arith.addf %63, %64 : vector<2x32xf32>
    %66 = arith.negf %65 : vector<2x32xf32>
    %67 = math.exp %66 : vector<2x32xf32>
    %cst_22 = arith.constant 1.000000e+00 : f32
    %68 = vector.broadcast %cst_22 : f32 to vector<2x32xf32>
    %69 = arith.addf %68, %67 : vector<2x32xf32>
    %70 = arith.divf %68, %69 : vector<2x32xf32>
    %71 = vector.extract_strided_slice %52 {offsets = [0, 64], sizes = [2, 32], strides = [1, 1]} : vector<2x96xf32> to vector<2x32xf32>
    %72 = vector.extract_strided_slice %54 {offsets = [0, 64], sizes = [2, 32], strides = [1, 1]} : vector<2x96xf32> to vector<2x32xf32>
    %73 = arith.mulf %62, %72 : vector<2x32xf32>
    %74 = arith.addf %71, %73 : vector<2x32xf32>
    %75 = math.tanh %74 : vector<2x32xf32>
    %76 = arith.subf %41, %75 : vector<2x32xf32>
    %77 = arith.mulf %70, %76 : vector<2x32xf32>
    %78 = arith.addf %75, %77 : vector<2x32xf32>
    %79 = arith.truncf %78 : vector<2x32xf32> to vector<2x32xbf16>
    %cst_23 = arith.constant dense<0.000000e+00> : vector<2x16xf32>
    %80 = tpu.matmul %79, %4, %cst_23 {dimension_numbers = #tpu.dot_dimension_numbers<[1], [0], [0], [1], [0, 0, 1, 1], [], []>} : vector<2x32xbf16>, vector<32x16xbf16>, vector<2x16xf32> -> vector<2x16xf32>
    %81 = arith.addf %80, %10 : vector<2x16xf32>
    %82 = arith.index_cast %c1_i32 : i32 to index
    %c0_24 = arith.constant 0 : index
    %c0_25 = arith.constant 0 : index
    %83 = vector.load %arg6[%82, %c0_24, %c0_25] : memref<8x2x16xf32, #tpu.memory_space<vmem>>, vector<1x2x16xf32>
    %84 = vector.shape_cast %83 : vector<1x2x16xf32> to vector<2x16xf32>
    %85 = vector.shape_cast %81 : vector<2x16xf32> to vector<1x2x16xf32>
    tpu.vector_store %arg6[%82, %c0_24, %c0_25], %85 {strides = array<i32>} : memref<8x2x16xf32, #tpu.memory_space<vmem>>, vector<1x2x16xf32>,
    %c2_i32 = arith.constant 2 : i32
    %86 = arith.index_cast %c2_i32 : i32 to index
    %c0_26 = arith.constant 0 : index
    %c0_27 = arith.constant 0 : index
    %87 = vector.load %arg1[%86, %c0_26, %c0_27] : memref<8x2x96xbf16, #tpu.memory_space<vmem>>, vector<1x2x96xbf16>
    %88 = vector.shape_cast %87 : vector<1x2x96xbf16> to vector<2x96xbf16>
    %89 = arith.extf %88 : vector<2x96xbf16> to vector<2x96xf32>
    %cst_28 = arith.constant dense<0.000000e+00> : vector<2x96xf32>
    %90 = tpu.matmul %78, %3, %cst_28 {dimension_numbers = #tpu.dot_dimension_numbers<[1], [0], [0], [1], [0, 0, 1, 1], [], []>} : vector<2x32xf32>, vector<32x96xf32>, vector<2x96xf32> -> vector<2x96xf32>
    %91 = arith.addf %90, %7 : vector<2x96xf32>
    %92 = vector.extract_strided_slice %89 {offsets = [0, 0], sizes = [2, 32], strides = [1, 1]} : vector<2x96xf32> to vector<2x32xf32>
    %93 = vector.extract_strided_slice %91 {offsets = [0, 0], sizes = [2, 32], strides = [1, 1]} : vector<2x96xf32> to vector<2x32xf32>
    %94 = arith.addf %92, %93 : vector<2x32xf32>
    %95 = arith.negf %94 : vector<2x32xf32>
    %96 = math.exp %95 : vector<2x32xf32>
    %cst_29 = arith.constant 1.000000e+00 : f32
    %97 = vector.broadcast %cst_29 : f32 to vector<2x32xf32>
    %98 = arith.addf %97, %96 : vector<2x32xf32>
    %99 = arith.divf %97, %98 : vector<2x32xf32>
    %100 = vector.extract_strided_slice %89 {offsets = [0, 32], sizes = [2, 32], strides = [1, 1]} : vector<2x96xf32> to vector<2x32xf32>
    %101 = vector.extract_strided_slice %91 {offsets = [0, 32], sizes = [2, 32], strides = [1, 1]} : vector<2x96xf32> to vector<2x32xf32>
    %102 = arith.addf %100, %101 : vector<2x32xf32>
    %103 = arith.negf %102 : vector<2x32xf32>
    %104 = math.exp %103 : vector<2x32xf32>
    %cst_30 = arith.constant 1.000000e+00 : f32
    %105 = vector.broadcast %cst_30 : f32 to vector<2x32xf32>
    %106 = arith.addf %105, %104 : vector<2x32xf32>
    %107 = arith.divf %105, %106 : vector<2x32xf32>
    %108 = vector.extract_strided_slice %89 {offsets = [0, 64], sizes = [2, 32], strides = [1, 1]} : vector<2x96xf32> to vector<2x32xf32>
    %109 = vector.extract_strided_slice %91 {offsets = [0, 64], sizes = [2, 32], strides = [1, 1]} : vector<2x96xf32> to vector<2x32xf32>
    %110 = arith.mulf %99, %109 : vector<2x32xf32>
    %111 = arith.addf %108, %110 : vector<2x32xf32>
    %112 = math.tanh %111 : vector<2x32xf32>
    %113 = arith.subf %78, %112 : vector<2x32xf32>
    %114 = arith.mulf %107, %113 : vector<2x32xf32>
    %115 = arith.addf %112, %114 : vector<2x32xf32>
    %116 = arith.truncf %115 : vector<2x32xf32> to vector<2x32xbf16>
    %cst_31 = arith.constant dense<0.000000e+00> : vector<2x16xf32>
    %117 = tpu.matmul %116, %4, %cst_31 {dimension_numbers = #tpu.dot_dimension_numbers<[1], [0], [0], [1], [0, 0, 1, 1], [], []>} : vector<2x32xbf16>, vector<32x16xbf16>, vector<2x16xf32> -> vector<2x16xf32>
    %118 = arith.addf %117, %10 : vector<2x16xf32>
    %119 = arith.index_cast %c2_i32 : i32 to index
    %c0_32 = arith.constant 0 : index
    %c0_33 = arith.constant 0 : index
    %120 = vector.load %arg6[%119, %c0_32, %c0_33] : memref<8x2x16xf32, #tpu.memory_space<vmem>>, vector<1x2x16xf32>
    %121 = vector.shape_cast %120 : vector<1x2x16xf32> to vector<2x16xf32>
    %122 = vector.shape_cast %118 : vector<2x16xf32> to vector<1x2x16xf32>
    tpu.vector_store %arg6[%119, %c0_32, %c0_33], %122 {strides = array<i32>} : memref<8x2x16xf32, #tpu.memory_space<vmem>>, vector<1x2x16xf32>,
    %c3_i32 = arith.constant 3 : i32
    %123 = arith.index_cast %c3_i32 : i32 to index
    %c0_34 = arith.constant 0 : index
    %c0_35 = arith.constant 0 : index
    %124 = vector.load %arg1[%123, %c0_34, %c0_35] : memref<8x2x96xbf16, #tpu.memory_space<vmem>>, vector<1x2x96xbf16>
    %125 = vector.shape_cast %124 : vector<1x2x96xbf16> to vector<2x96xbf16>
    %126 = arith.extf %125 : vector<2x96xbf16> to vector<2x96xf32>
    %cst_36 = arith.constant dense<0.000000e+00> : vector<2x96xf32>
    %127 = tpu.matmul %115, %3, %cst_36 {dimension_numbers = #tpu.dot_dimension_numbers<[1], [0], [0], [1], [0, 0, 1, 1], [], []>} : vector<2x32xf32>, vector<32x96xf32>, vector<2x96xf32> -> vector<2x96xf32>
    %128 = arith.addf %127, %7 : vector<2x96xf32>
    %129 = vector.extract_strided_slice %126 {offsets = [0, 0], sizes = [2, 32], strides = [1, 1]} : vector<2x96xf32> to vector<2x32xf32>
    %130 = vector.extract_strided_slice %128 {offsets = [0, 0], sizes = [2, 32], strides = [1, 1]} : vector<2x96xf32> to vector<2x32xf32>
    %131 = arith.addf %129, %130 : vector<2x32xf32>
    %132 = arith.negf %131 : vector<2x32xf32>
    %133 = math.exp %132 : vector<2x32xf32>
    %cst_37 = arith.constant 1.000000e+00 : f32
    %134 = vector.broadcast %cst_37 : f32 to vector<2x32xf32>
    %135 = arith.addf %134, %133 : vector<2x32xf32>
    %136 = arith.divf %134, %135 : vector<2x32xf32>
    %137 = vector.extract_strided_slice %126 {offsets = [0, 32], sizes = [2, 32], strides = [1, 1]} : vector<2x96xf32> to vector<2x32xf32>
    %138 = vector.extract_strided_slice %128 {offsets = [0, 32], sizes = [2, 32], strides = [1, 1]} : vector<2x96xf32> to vector<2x32xf32>
    %139 = arith.addf %137, %138 : vector<2x32xf32>
    %140 = arith.negf %139 : vector<2x32xf32>
    %141 = math.exp %140 : vector<2x32xf32>
    %cst_38 = arith.constant 1.000000e+00 : f32
    %142 = vector.broadcast %cst_38 : f32 to vector<2x32xf32>
    %143 = arith.addf %142, %141 : vector<2x32xf32>
    %144 = arith.divf %142, %143 : vector<2x32xf32>
    %145 = vector.extract_strided_slice %126 {offsets = [0, 64], sizes = [2, 32], strides = [1, 1]} : vector<2x96xf32> to vector<2x32xf32>
    %146 = vector.extract_strided_slice %128 {offsets = [0, 64], sizes = [2, 32], strides = [1, 1]} : vector<2x96xf32> to vector<2x32xf32>
    %147 = arith.mulf %136, %146 : vector<2x32xf32>
    %148 = arith.addf %145, %147 : vector<2x32xf32>
    %149 = math.tanh %148 : vector<2x32xf32>
    %150 = arith.subf %115, %149 : vector<2x32xf32>
    %151 = arith.mulf %144, %150 : vector<2x32xf32>
    %152 = arith.addf %149, %151 : vector<2x32xf32>
    %153 = arith.truncf %152 : vector<2x32xf32> to vector<2x32xbf16>
    %cst_39 = arith.constant dense<0.000000e+00> : vector<2x16xf32>
    %154 = tpu.matmul %153, %4, %cst_39 {dimension_numbers = #tpu.dot_dimension_numbers<[1], [0], [0], [1], [0, 0, 1, 1], [], []>} : vector<2x32xbf16>, vector<32x16xbf16>, vector<2x16xf32> -> vector<2x16xf32>
    %155 = arith.addf %154, %10 : vector<2x16xf32>
    %156 = arith.index_cast %c3_i32 : i32 to index
    %c0_40 = arith.constant 0 : index
    %c0_41 = arith.constant 0 : index
    %157 = vector.load %arg6[%156, %c0_40, %c0_41] : memref<8x2x16xf32, #tpu.memory_space<vmem>>, vector<1x2x16xf32>
    %158 = vector.shape_cast %157 : vector<1x2x16xf32> to vector<2x16xf32>
    %159 = vector.shape_cast %155 : vector<2x16xf32> to vector<1x2x16xf32>
    tpu.vector_store %arg6[%156, %c0_40, %c0_41], %159 {strides = array<i32>} : memref<8x2x16xf32, #tpu.memory_space<vmem>>, vector<1x2x16xf32>,
    %c4_i32 = arith.constant 4 : i32
    %160 = arith.index_cast %c4_i32 : i32 to index
    %c0_42 = arith.constant 0 : index
    %c0_43 = arith.constant 0 : index
    %161 = vector.load %arg1[%160, %c0_42, %c0_43] : memref<8x2x96xbf16, #tpu.memory_space<vmem>>, vector<1x2x96xbf16>
    %162 = vector.shape_cast %161 : vector<1x2x96xbf16> to vector<2x96xbf16>
    %163 = arith.extf %162 : vector<2x96xbf16> to vector<2x96xf32>
    %cst_44 = arith.constant dense<0.000000e+00> : vector<2x96xf32>
    %164 = tpu.matmul %152, %3, %cst_44 {dimension_numbers = #tpu.dot_dimension_numbers<[1], [0], [0], [1], [0, 0, 1, 1], [], []>} : vector<2x32xf32>, vector<32x96xf32>, vector<2x96xf32> -> vector<2x96xf32>
    %165 = arith.addf %164, %7 : vector<2x96xf32>
    %166 = vector.extract_strided_slice %163 {offsets = [0, 0], sizes = [2, 32], strides = [1, 1]} : vector<2x96xf32> to vector<2x32xf32>
    %167 = vector.extract_strided_slice %165 {offsets = [0, 0], sizes = [2, 32], strides = [1, 1]} : vector<2x96xf32> to vector<2x32xf32>
    %168 = arith.addf %166, %167 : vector<2x32xf32>
    %169 = arith.negf %168 : vector<2x32xf32>
    %170 = math.exp %169 : vector<2x32xf32>
    %cst_45 = arith.constant 1.000000e+00 : f32
    %171 = vector.broadcast %cst_45 : f32 to vector<2x32xf32>
    %172 = arith.addf %171, %170 : vector<2x32xf32>
    %173 = arith.divf %171, %172 : vector<2x32xf32>
    %174 = vector.extract_strided_slice %163 {offsets = [0, 32], sizes = [2, 32], strides = [1, 1]} : vector<2x96xf32> to vector<2x32xf32>
    %175 = vector.extract_strided_slice %165 {offsets = [0, 32], sizes = [2, 32], strides = [1, 1]} : vector<2x96xf32> to vector<2x32xf32>
    %176 = arith.addf %174, %175 : vector<2x32xf32>
    %177 = arith.negf %176 : vector<2x32xf32>
    %178 = math.exp %177 : vector<2x32xf32>
    %cst_46 = arith.constant 1.000000e+00 : f32
    %179 = vector.broadcast %cst_46 : f32 to vector<2x32xf32>
    %180 = arith.addf %179, %178 : vector<2x32xf32>
    %181 = arith.divf %179, %180 : vector<2x32xf32>
    %182 = vector.extract_strided_slice %163 {offsets = [0, 64], sizes = [2, 32], strides = [1, 1]} : vector<2x96xf32> to vector<2x32xf32>
    %183 = vector.extract_strided_slice %165 {offsets = [0, 64], sizes = [2, 32], strides = [1, 1]} : vector<2x96xf32> to vector<2x32xf32>
    %184 = arith.mulf %173, %183 : vector<2x32xf32>
    %185 = arith.addf %182, %184 : vector<2x32xf32>
    %186 = math.tanh %185 : vector<2x32xf32>
    %187 = arith.subf %152, %186 : vector<2x32xf32>
    %188 = arith.mulf %181, %187 : vector<2x32xf32>
    %189 = arith.addf %186, %188 : vector<2x32xf32>
    %190 = arith.truncf %189 : vector<2x32xf32> to vector<2x32xbf16>
    %cst_47 = arith.constant dense<0.000000e+00> : vector<2x16xf32>
    %191 = tpu.matmul %190, %4, %cst_47 {dimension_numbers = #tpu.dot_dimension_numbers<[1], [0], [0], [1], [0, 0, 1, 1], [], []>} : vector<2x32xbf16>, vector<32x16xbf16>, vector<2x16xf32> -> vector<2x16xf32>
    %192 = arith.addf %191, %10 : vector<2x16xf32>
    %193 = arith.index_cast %c4_i32 : i32 to index
    %c0_48 = arith.constant 0 : index
    %c0_49 = arith.constant 0 : index
    %194 = vector.load %arg6[%193, %c0_48, %c0_49] : memref<8x2x16xf32, #tpu.memory_space<vmem>>, vector<1x2x16xf32>
    %195 = vector.shape_cast %194 : vector<1x2x16xf32> to vector<2x16xf32>
    %196 = vector.shape_cast %192 : vector<2x16xf32> to vector<1x2x16xf32>
    tpu.vector_store %arg6[%193, %c0_48, %c0_49], %196 {strides = array<i32>} : memref<8x2x16xf32, #tpu.memory_space<vmem>>, vector<1x2x16xf32>,
    %c5_i32 = arith.constant 5 : i32
    %197 = arith.index_cast %c5_i32 : i32 to index
    %c0_50 = arith.constant 0 : index
    %c0_51 = arith.constant 0 : index
    %198 = vector.load %arg1[%197, %c0_50, %c0_51] : memref<8x2x96xbf16, #tpu.memory_space<vmem>>, vector<1x2x96xbf16>
    %199 = vector.shape_cast %198 : vector<1x2x96xbf16> to vector<2x96xbf16>
    %200 = arith.extf %199 : vector<2x96xbf16> to vector<2x96xf32>
    %cst_52 = arith.constant dense<0.000000e+00> : vector<2x96xf32>
    %201 = tpu.matmul %189, %3, %cst_52 {dimension_numbers = #tpu.dot_dimension_numbers<[1], [0], [0], [1], [0, 0, 1, 1], [], []>} : vector<2x32xf32>, vector<32x96xf32>, vector<2x96xf32> -> vector<2x96xf32>
    %202 = arith.addf %201, %7 : vector<2x96xf32>
    %203 = vector.extract_strided_slice %200 {offsets = [0, 0], sizes = [2, 32], strides = [1, 1]} : vector<2x96xf32> to vector<2x32xf32>
    %204 = vector.extract_strided_slice %202 {offsets = [0, 0], sizes = [2, 32], strides = [1, 1]} : vector<2x96xf32> to vector<2x32xf32>
    %205 = arith.addf %203, %204 : vector<2x32xf32>
    %206 = arith.negf %205 : vector<2x32xf32>
    %207 = math.exp %206 : vector<2x32xf32>
    %cst_53 = arith.constant 1.000000e+00 : f32
    %208 = vector.broadcast %cst_53 : f32 to vector<2x32xf32>
    %209 = arith.addf %208, %207 : vector<2x32xf32>
    %210 = arith.divf %208, %209 : vector<2x32xf32>
    %211 = vector.extract_strided_slice %200 {offsets = [0, 32], sizes = [2, 32], strides = [1, 1]} : vector<2x96xf32> to vector<2x32xf32>
    %212 = vector.extract_strided_slice %202 {offsets = [0, 32], sizes = [2, 32], strides = [1, 1]} : vector<2x96xf32> to vector<2x32xf32>
    %213 = arith.addf %211, %212 : vector<2x32xf32>
    %214 = arith.negf %213 : vector<2x32xf32>
    %215 = math.exp %214 : vector<2x32xf32>
    %cst_54 = arith.constant 1.000000e+00 : f32
    %216 = vector.broadcast %cst_54 : f32 to vector<2x32xf32>
    %217 = arith.addf %216, %215 : vector<2x32xf32>
    %218 = arith.divf %216, %217 : vector<2x32xf32>
    %219 = vector.extract_strided_slice %200 {offsets = [0, 64], sizes = [2, 32], strides = [1, 1]} : vector<2x96xf32> to vector<2x32xf32>
    %220 = vector.extract_strided_slice %202 {offsets = [0, 64], sizes = [2, 32], strides = [1, 1]} : vector<2x96xf32> to vector<2x32xf32>
    %221 = arith.mulf %210, %220 : vector<2x32xf32>
    %222 = arith.addf %219, %221 : vector<2x32xf32>
    %223 = math.tanh %222 : vector<2x32xf32>
    %224 = arith.subf %189, %223 : vector<2x32xf32>
    %225 = arith.mulf %218, %224 : vector<2x32xf32>
    %226 = arith.addf %223, %225 : vector<2x32xf32>
    %227 = arith.truncf %226 : vector<2x32xf32> to vector<2x32xbf16>
    %cst_55 = arith.constant dense<0.000000e+00> : vector<2x16xf32>
    %228 = tpu.matmul %227, %4, %cst_55 {dimension_numbers = #tpu.dot_dimension_numbers<[1], [0], [0], [1], [0, 0, 1, 1], [], []>} : vector<2x32xbf16>, vector<32x16xbf16>, vector<2x16xf32> -> vector<2x16xf32>
    %229 = arith.addf %228, %10 : vector<2x16xf32>
    %230 = arith.index_cast %c5_i32 : i32 to index
    %c0_56 = arith.constant 0 : index
    %c0_57 = arith.constant 0 : index
    %231 = vector.load %arg6[%230, %c0_56, %c0_57] : memref<8x2x16xf32, #tpu.memory_space<vmem>>, vector<1x2x16xf32>
    %232 = vector.shape_cast %231 : vector<1x2x16xf32> to vector<2x16xf32>
    %233 = vector.shape_cast %229 : vector<2x16xf32> to vector<1x2x16xf32>
    tpu.vector_store %arg6[%230, %c0_56, %c0_57], %233 {strides = array<i32>} : memref<8x2x16xf32, #tpu.memory_space<vmem>>, vector<1x2x16xf32>,
    %c6_i32 = arith.constant 6 : i32
    %234 = arith.index_cast %c6_i32 : i32 to index
    %c0_58 = arith.constant 0 : index
    %c0_59 = arith.constant 0 : index
    %235 = vector.load %arg1[%234, %c0_58, %c0_59] : memref<8x2x96xbf16, #tpu.memory_space<vmem>>, vector<1x2x96xbf16>
    %236 = vector.shape_cast %235 : vector<1x2x96xbf16> to vector<2x96xbf16>
    %237 = arith.extf %236 : vector<2x96xbf16> to vector<2x96xf32>
    %cst_60 = arith.constant dense<0.000000e+00> : vector<2x96xf32>
    %238 = tpu.matmul %226, %3, %cst_60 {dimension_numbers = #tpu.dot_dimension_numbers<[1], [0], [0], [1], [0, 0, 1, 1], [], []>} : vector<2x32xf32>, vector<32x96xf32>, vector<2x96xf32> -> vector<2x96xf32>
    %239 = arith.addf %238, %7 : vector<2x96xf32>
    %240 = vector.extract_strided_slice %237 {offsets = [0, 0], sizes = [2, 32], strides = [1, 1]} : vector<2x96xf32> to vector<2x32xf32>
    %241 = vector.extract_strided_slice %239 {offsets = [0, 0], sizes = [2, 32], strides = [1, 1]} : vector<2x96xf32> to vector<2x32xf32>
    %242 = arith.addf %240, %241 : vector<2x32xf32>
    %243 = arith.negf %242 : vector<2x32xf32>
    %244 = math.exp %243 : vector<2x32xf32>
    %cst_61 = arith.constant 1.000000e+00 : f32
    %245 = vector.broadcast %cst_61 : f32 to vector<2x32xf32>
    %246 = arith.addf %245, %244 : vector<2x32xf32>
    %247 = arith.divf %245, %246 : vector<2x32xf32>
    %248 = vector.extract_strided_slice %237 {offsets = [0, 32], sizes = [2, 32], strides = [1, 1]} : vector<2x96xf32> to vector<2x32xf32>
    %249 = vector.extract_strided_slice %239 {offsets = [0, 32], sizes = [2, 32], strides = [1, 1]} : vector<2x96xf32> to vector<2x32xf32>
    %250 = arith.addf %248, %249 : vector<2x32xf32>
    %251 = arith.negf %250 : vector<2x32xf32>
    %252 = math.exp %251 : vector<2x32xf32>
    %cst_62 = arith.constant 1.000000e+00 : f32
    %253 = vector.broadcast %cst_62 : f32 to vector<2x32xf32>
    %254 = arith.addf %253, %252 : vector<2x32xf32>
    %255 = arith.divf %253, %254 : vector<2x32xf32>
    %256 = vector.extract_strided_slice %237 {offsets = [0, 64], sizes = [2, 32], strides = [1, 1]} : vector<2x96xf32> to vector<2x32xf32>
    %257 = vector.extract_strided_slice %239 {offsets = [0, 64], sizes = [2, 32], strides = [1, 1]} : vector<2x96xf32> to vector<2x32xf32>
    %258 = arith.mulf %247, %257 : vector<2x32xf32>
    %259 = arith.addf %256, %258 : vector<2x32xf32>
    %260 = math.tanh %259 : vector<2x32xf32>
    %261 = arith.subf %226, %260 : vector<2x32xf32>
    %262 = arith.mulf %255, %261 : vector<2x32xf32>
    %263 = arith.addf %260, %262 : vector<2x32xf32>
    %264 = arith.truncf %263 : vector<2x32xf32> to vector<2x32xbf16>
    %cst_63 = arith.constant dense<0.000000e+00> : vector<2x16xf32>
    %265 = tpu.matmul %264, %4, %cst_63 {dimension_numbers = #tpu.dot_dimension_numbers<[1], [0], [0], [1], [0, 0, 1, 1], [], []>} : vector<2x32xbf16>, vector<32x16xbf16>, vector<2x16xf32> -> vector<2x16xf32>
    %266 = arith.addf %265, %10 : vector<2x16xf32>
    %267 = arith.index_cast %c6_i32 : i32 to index
    %c0_64 = arith.constant 0 : index
    %c0_65 = arith.constant 0 : index
    %268 = vector.load %arg6[%267, %c0_64, %c0_65] : memref<8x2x16xf32, #tpu.memory_space<vmem>>, vector<1x2x16xf32>
    %269 = vector.shape_cast %268 : vector<1x2x16xf32> to vector<2x16xf32>
    %270 = vector.shape_cast %266 : vector<2x16xf32> to vector<1x2x16xf32>
    tpu.vector_store %arg6[%267, %c0_64, %c0_65], %270 {strides = array<i32>} : memref<8x2x16xf32, #tpu.memory_space<vmem>>, vector<1x2x16xf32>,
    %c7_i32 = arith.constant 7 : i32
    %271 = arith.index_cast %c7_i32 : i32 to index
    %c0_66 = arith.constant 0 : index
    %c0_67 = arith.constant 0 : index
    %272 = vector.load %arg1[%271, %c0_66, %c0_67] : memref<8x2x96xbf16, #tpu.memory_space<vmem>>, vector<1x2x96xbf16>
    %273 = vector.shape_cast %272 : vector<1x2x96xbf16> to vector<2x96xbf16>
    %274 = arith.extf %273 : vector<2x96xbf16> to vector<2x96xf32>
    %cst_68 = arith.constant dense<0.000000e+00> : vector<2x96xf32>
    %275 = tpu.matmul %263, %3, %cst_68 {dimension_numbers = #tpu.dot_dimension_numbers<[1], [0], [0], [1], [0, 0, 1, 1], [], []>} : vector<2x32xf32>, vector<32x96xf32>, vector<2x96xf32> -> vector<2x96xf32>
    %276 = arith.addf %275, %7 : vector<2x96xf32>
    %277 = vector.extract_strided_slice %274 {offsets = [0, 0], sizes = [2, 32], strides = [1, 1]} : vector<2x96xf32> to vector<2x32xf32>
    %278 = vector.extract_strided_slice %276 {offsets = [0, 0], sizes = [2, 32], strides = [1, 1]} : vector<2x96xf32> to vector<2x32xf32>
    %279 = arith.addf %277, %278 : vector<2x32xf32>
    %280 = arith.negf %279 : vector<2x32xf32>
    %281 = math.exp %280 : vector<2x32xf32>
    %cst_69 = arith.constant 1.000000e+00 : f32
    %282 = vector.broadcast %cst_69 : f32 to vector<2x32xf32>
    %283 = arith.addf %282, %281 : vector<2x32xf32>
    %284 = arith.divf %282, %283 : vector<2x32xf32>
    %285 = vector.extract_strided_slice %274 {offsets = [0, 32], sizes = [2, 32], strides = [1, 1]} : vector<2x96xf32> to vector<2x32xf32>
    %286 = vector.extract_strided_slice %276 {offsets = [0, 32], sizes = [2, 32], strides = [1, 1]} : vector<2x96xf32> to vector<2x32xf32>
    %287 = arith.addf %285, %286 : vector<2x32xf32>
    %288 = arith.negf %287 : vector<2x32xf32>
    %289 = math.exp %288 : vector<2x32xf32>
    %cst_70 = arith.constant 1.000000e+00 : f32
    %290 = vector.broadcast %cst_70 : f32 to vector<2x32xf32>
    %291 = arith.addf %290, %289 : vector<2x32xf32>
    %292 = arith.divf %290, %291 : vector<2x32xf32>
    %293 = vector.extract_strided_slice %274 {offsets = [0, 64], sizes = [2, 32], strides = [1, 1]} : vector<2x96xf32> to vector<2x32xf32>
    %294 = vector.extract_strided_slice %276 {offsets = [0, 64], sizes = [2, 32], strides = [1, 1]} : vector<2x96xf32> to vector<2x32xf32>
    %295 = arith.mulf %284, %294 : vector<2x32xf32>
    %296 = arith.addf %293, %295 : vector<2x32xf32>
    %297 = math.tanh %296 : vector<2x32xf32>
    %298 = arith.subf %263, %297 : vector<2x32xf32>
    %299 = arith.mulf %292, %298 : vector<2x32xf32>
    %300 = arith.addf %297, %299 : vector<2x32xf32>
    %301 = arith.truncf %300 : vector<2x32xf32> to vector<2x32xbf16>
    %cst_71 = arith.constant dense<0.000000e+00> : vector<2x16xf32>
    %302 = tpu.matmul %301, %4, %cst_71 {dimension_numbers = #tpu.dot_dimension_numbers<[1], [0], [0], [1], [0, 0, 1, 1], [], []>} : vector<2x32xbf16>, vector<32x16xbf16>, vector<2x16xf32> -> vector<2x16xf32>
    %303 = arith.addf %302, %10 : vector<2x16xf32>
    %304 = arith.index_cast %c7_i32 : i32 to index
    %c0_72 = arith.constant 0 : index
    %c0_73 = arith.constant 0 : index
    %305 = vector.load %arg6[%304, %c0_72, %c0_73] : memref<8x2x16xf32, #tpu.memory_space<vmem>>, vector<1x2x16xf32>
    %306 = vector.shape_cast %305 : vector<1x2x16xf32> to vector<2x16xf32>
    %307 = vector.shape_cast %303 : vector<2x16xf32> to vector<1x2x16xf32>
    tpu.vector_store %arg6[%304, %c0_72, %c0_73], %307 {strides = array<i32>} : memref<8x2x16xf32, #tpu.memory_space<vmem>>, vector<1x2x16xf32>,
    %c8_i32 = arith.constant 8 : i32
    %c0_74 = arith.constant 0 : index
    %c0_75 = arith.constant 0 : index
    %308 = vector.load %arg8[%c0_74, %c0_75] : memref<2x32xf32, #tpu.memory_space<vmem>>, vector<2x32xf32>
    tpu.vector_store %arg8[%c0_74, %c0_75], %300 {strides = array<i32>} : memref<2x32xf32, #tpu.memory_space<vmem>>, vector<2x32xf32>,
    %c0_76 = arith.constant 0 : index
    %c0_77 = arith.constant 0 : index
    %309 = vector.load %arg7[%c0_76, %c0_77] : memref<2x32xf32, #tpu.memory_space<vmem>>, vector<2x32xf32>
    tpu.vector_store %arg7[%c0_76, %c0_77], %300 {strides = array<i32>} : memref<2x32xf32, #tpu.memory_space<vmem>>, vector<2x32xf32>,
    return
  }
  func.func @transform_0(%arg0: i32) -> (i32, i32, i32) {
    %c0_i32 = arith.constant 0 : i32
    %c0_i32_0 = arith.constant 0 : i32
    %c0_i32_1 = arith.constant 0 : i32
    return %arg0, %c0_i32, %c0_i32_0 : i32, i32, i32
  }
  func.func @transform_1(%arg0: i32) -> (i32, i32) {
    %c0_i32 = arith.constant 0 : i32
    %c0_i32_0 = arith.constant 0 : i32
    %c0_i32_1 = arith.constant 0 : i32
    return %c0_i32, %c0_i32_0 : i32, i32
  }
  func.func @transform_2(%arg0: i32) -> (i32, i32) {
    %c0_i32 = arith.constant 0 : i32
    %c0_i32_0 = arith.constant 0 : i32
    %c0_i32_1 = arith.constant 0 : i32
    return %c0_i32, %c0_i32_0 : i32, i32
  }
  func.func @transform_3(%arg0: i32) -> (i32, i32) {
    %c0_i32 = arith.constant 0 : i32
    %c0_i32_0 = arith.constant 0 : i32
    %c0_i32_1 = arith.constant 0 : i32
    return %c0_i32, %c0_i32_0 : i32, i32
  }
  func.func @transform_4(%arg0: i32) -> (i32, i32) {
    %c0_i32 = arith.constant 0 : i32
    %c0_i32_0 = arith.constant 0 : i32
    %c0_i32_1 = arith.constant 0 : i32
    return %c0_i32, %c0_i32_0 : i32, i32
  }
  func.func @transform_5(%arg0: i32) -> (i32, i32, i32) {
    %c0_i32 = arith.constant 0 : i32
    %c0_i32_0 = arith.constant 0 : i32
    %c0_i32_1 = arith.constant 0 : i32
    return %arg0, %c0_i32, %c0_i32_0 : i32, i32, i32
  }
  func.func @transform_6(%arg0: i32) -> (i32, i32) {
    %c0_i32 = arith.constant 0 : i32
    %c0_i32_0 = arith.constant 0 : i32
    %c0_i32_1 = arith.constant 0 : i32
    return %c0_i32, %c0_i32_0 : i32, i32
  }
}

module attributes {stable_mosaic.version = 11 : i64} {
  func.func @_dense_kernel(%arg0: i32, %arg1: i32, %arg2: memref<2x32xbf16, #tpu.memory_space<vmem>>, %arg3: memref<32x16xbf16, #tpu.memory_space<vmem>>, %arg4: memref<1x16xf32, #tpu.memory_space<vmem>>, %arg5: memref<2x16xf32, #tpu.memory_space<vmem>>) attributes {dimension_semantics = [#tpu.dimension_semantics<parallel>, #tpu.dimension_semantics<parallel>], iteration_bounds = array<i64: 1, 1>, scalar_prefetch = 0 : i64, scratch_operands = 0 : i64, tpu.core_type = #tpu.core_type<tc>, window_params = [{transform_indices = @transform_0, window_bounds = array<i64: 2, 32>}, {transform_indices = @transform_1, window_bounds = array<i64: 32, 16>}, {transform_indices = @transform_2, window_bounds = array<i64: 1, 16>}, {transform_indices = @transform_3, window_bounds = array<i64: 2, 16>}]} {
    %c0 = arith.constant 0 : index
    %c0_0 = arith.constant 0 : index
    %0 = vector.load %arg2[%c0, %c0_0] : memref<2x32xbf16, #tpu.memory_space<vmem>>, vector<2x32xbf16>
    %c0_1 = arith.constant 0 : index
    %c0_2 = arith.constant 0 : index
    %1 = vector.load %arg3[%c0_1, %c0_2] : memref<32x16xbf16, #tpu.memory_space<vmem>>, vector<32x16xbf16>
    %cst = arith.constant dense<0.000000e+00> : vector<2x16xf32>
    %2 = tpu.matmul %0, %1, %cst {dimension_numbers = #tpu.dot_dimension_numbers<[1], [0], [0], [1], [0, 0, 1, 1], [], []>} : vector<2x32xbf16>, vector<32x16xbf16>, vector<2x16xf32> -> vector<2x16xf32>
    %c0_3 = arith.constant 0 : index
    %c0_4 = arith.constant 0 : index
    %3 = vector.load %arg4[%c0_3, %c0_4] : memref<1x16xf32, #tpu.memory_space<vmem>>, vector<1x16xf32>
    %4 = vector.broadcast %3 : vector<1x16xf32> to vector<2x16xf32>
    %5 = arith.addf %2, %4 : vector<2x16xf32>
    %c0_5 = arith.constant 0 : index
    %c0_6 = arith.constant 0 : index
    %6 = vector.load %arg5[%c0_5, %c0_6] : memref<2x16xf32, #tpu.memory_space<vmem>>, vector<2x16xf32>
    tpu.vector_store %arg5[%c0_5, %c0_6], %5 {strides = array<i32>} : memref<2x16xf32, #tpu.memory_space<vmem>>, vector<2x16xf32>,
    return
  }
  func.func @transform_0(%arg0: i32, %arg1: i32) -> (i32, i32) {
    %c0_i32 = arith.constant 0 : i32
    %c0_i32_0 = arith.constant 0 : i32
    return %arg0, %c0_i32 : i32, i32
  }
  func.func @transform_1(%arg0: i32, %arg1: i32) -> (i32, i32) {
    %c0_i32 = arith.constant 0 : i32
    %c0_i32_0 = arith.constant 0 : i32
    return %c0_i32, %arg1 : i32, i32
  }
  func.func @transform_2(%arg0: i32, %arg1: i32) -> (i32, i32) {
    %c0_i32 = arith.constant 0 : i32
    %c0_i32_0 = arith.constant 0 : i32
    return %c0_i32, %arg1 : i32, i32
  }
  func.func @transform_3(%arg0: i32, %arg1: i32) -> (i32, i32) {
    %c0_i32 = arith.constant 0 : i32
    return %arg0, %arg1 : i32, i32
  }
}

</mosaic_0001>

<llo_original>
// kernel: encoder_rnn_forward.5
$region0: #{encoder_rnn_forward.5}
  #allocation0 [shape = 'u32[]', space=smem, size = 0x4, offset = 0x4, fixed_abs, tag = 'smem constant byte address 0x4 - core index']
  #allocation1 [shape = 'u32[72,128]{1,0:T(1,128)}', space=vmem, size = 0x9000, scoped, tag = 'internal scratch']
  %s0 = inlined_call_operand.vmem [shape: bf16[2,32], index: 0, kind: input, shape index: {}]
  %s1 = inlined_call_operand.vmem [shape: bf16[32,16], index: 1, kind: input, shape index: {}]
  %s2 = inlined_call_operand.vmem [shape: f32[1,16], index: 2, kind: input, shape index: {}]
  %s3 = inlined_call_operand.hbm [shape: f32[2,16], index: 3, kind: output, shape index: {}]
  %s4 = sld [smem:[#allocation0]]
  $region22: #{encoder_rnn_forward.5} parent=0
    _
  %s6 = ssub.s32 1, %s4
  %s7 = scalar_select 0, %s6, %s4
  $region1: #{encoder_rnn_forward.5} parent=0
    #allocation2 [shape = 'u8[1024]{0}', space=vmem, size = 0x400, scoped, tag = 'output window, operand 0, single buffered']
    #allocation3 [shape = 's32[1]{0}', space=sflag, size = 0x4, scoped, tag = 'scoped memory for encoder_rnn_forward.5']
    %8 = vsyncpa [#allocation3], 0
    // Predicated region
    $region2: #{encoder_rnn_forward.5} parent=1 // pred_check
      _
    $region3: #{encoder_rnn_forward.5} parent=1 // pred_check_branch
      %10 = sbr.rel (0) target = $region5
    $region4: #{encoder_rnn_forward.5} parent=1 // pred_region
      _
    $region5: #{encoder_rnn_forward.5} parent=1 // pred_fallthru
      _
    // Predicated region
    $region6: #{encoder_rnn_forward.5} parent=1 // pred_check
      _
    $region7: #{encoder_rnn_forward.5} parent=1 // pred_check_branch
      %12 = sbr.rel (0) target = $region9
    $region8: #{encoder_rnn_forward.5} parent=1 // pred_region
      _
    $region9: #{encoder_rnn_forward.5} parent=1 // pred_fallthru
      _
    // Predicated region
    $region10: #{encoder_rnn_forward.5} parent=1 // pred_check
      _
    $region11: #{encoder_rnn_forward.5} parent=1 // pred_check_branch
      %14 = sbr.rel (0) target = $region13
    $region12: #{encoder_rnn_forward.5} parent=1 // pred_region
      _
    $region13: #{encoder_rnn_forward.5} parent=1 // pred_fallthru
      _
    %v16 = vld [vmem:[%s0] sm:$0x1]
    %v17 = vld [vmem:[%s1] sm:$0xf]
    %v18 = vld [vmem:[%s1 + $0x4] sm:$0xf]
    %v19 = vld [vmem:[%s1 + $0x8] sm:$0xf]
    %v20 = vld [vmem:[%s1 + $0xc] sm:$0xf]
    %v21 = vld [vmem:[%s2] sm:$0x1]
    %v23 = vperm.slane %v21, 0
    %v29 = vunpack.c.l.b16 %v17
    %v30 = vunpack.c.l.b16 %v18
    %v31 = vunpack.c.l.b16 %v19
    %v32 = vunpack.c.l.b16 %v20
    %v33 = vpack.c.b16 %v30, %v29
    %v34 = vpack.c.b16 %v32, %v31
    %vm37 = vcmask 261120
    %v39 = vsel %vm37, %v16, 0
    %41 = vmatpush.bf16.msra.mxu0 0
    %42 = vmatpush.bf16.msra.mxu0 0
    %43 = vmatpush.bf16.msra.mxu0 0
    %44 = vmatpush.bf16.msra.mxu0 0
    %45 = vmatpush.bf16.msra.mxu0 0
    %46 = vmatpush.bf16.msra.mxu0 0
    %47 = vmatpush.bf16.msra.mxu0 %v34
    %48 = vmatpush.bf16.msra.mxu0 %v33
    %49 = vmatmul.bf16.gmra.mxu0 %v39
    %v50 = vpop.f32.mrf.mxu0
    %v51 = vadd.f32 %v23, %v50
    %v52 = vpop.f32.mrf.mxu0
    %53 = vdwg.mxu0
    %vm54 = vcmask 123904
    %55 = vst.msk [vmem:[#allocation2] sm:$0x3] %vm54, %v51
    // Predicated region
    $region14: #{encoder_rnn_forward.5} parent=1 // pred_check
      _
    $region15: #{encoder_rnn_forward.5} parent=1 // pred_check_branch
      %57 = sbr.rel (0) target = $region17
    $region16: #{encoder_rnn_forward.5} parent=1 // pred_region
      %59 = vsyncadd [#allocation3], 0
      %s61 = sshll.u32 [#allocation2], 4
      %s62 = int_to_ptr.vmem [resolvable:$true] %s61
      %s63 = sshll.u32 %s3, 4
      %s64 = int_to_ptr.hbm [resolvable:$true] %s63
      %66 = dma.vmem_to_hbm [thread:$0]  %s62, 32, %s64, [#allocation3]
    $region17: #{encoder_rnn_forward.5} parent=1 // pred_fallthru
      _
    // Predicated region
    $region18: #{encoder_rnn_forward.5} parent=1 // pred_check
      _
    $region19: #{encoder_rnn_forward.5} parent=1 // pred_check_branch
      %68 = sbr.rel (0) target = $region21
    $region20: #{encoder_rnn_forward.5} parent=1 // pred_region
      %70 = dma.done [#allocation3], 32
    $region21: #{encoder_rnn_forward.5} parent=1 // pred_fallthru
      _
    %71 = vsyncpa [#allocation3], 1

// kernel: encoder_rnn_forward.3
$region0: #{encoder_rnn_forward.3}
  #allocation0 [shape = 'u32[]', space=smem, size = 0x4, offset = 0x4, fixed_abs, tag = 'smem constant byte address 0x4 - core index']
  #allocation1 [shape = 'u32[72,128]{1,0:T(1,128)}', space=vmem, size = 0x9000, scoped, tag = 'internal scratch']
  %s0 = inlined_call_operand.vmem [shape: bf16[16,16], index: 0, kind: input, shape index: {}]
  %s1 = inlined_call_operand.vmem [shape: bf16[16,96], index: 1, kind: input, shape index: {}]
  %s2 = inlined_call_operand.vmem [shape: f32[1,96], index: 2, kind: input, shape index: {}]
  %s3 = inlined_call_operand.vmem [shape: bf16[16,96], index: 3, kind: output, shape index: {}]
  %s4 = sld [smem:[#allocation0]]
  $region22: #{encoder_rnn_forward.3} parent=0
    _
  %s6 = ssub.s32 1, %s4
  %s7 = scalar_select 0, %s6, %s4
  // Predicated region
  $region2: #{encoder_rnn_forward.3} parent=0 // pred_check
    _
  $region3: #{encoder_rnn_forward.3} parent=0 // pred_check_branch
    %9 = sbr.rel (0) target = $region5
  $region4: #{encoder_rnn_forward.3} parent=0 // pred_region
    _
  $region5: #{encoder_rnn_forward.3} parent=0 // pred_fallthru
    _
  // Predicated region
  $region6: #{encoder_rnn_forward.3} parent=0 // pred_check
    _
  $region7: #{encoder_rnn_forward.3} parent=0 // pred_check_branch
    %11 = sbr.rel (0) target = $region9
  $region8: #{encoder_rnn_forward.3} parent=0 // pred_region
    _
  $region9: #{encoder_rnn_forward.3} parent=0 // pred_fallthru
    _
  // Predicated region
  $region10: #{encoder_rnn_forward.3} parent=0 // pred_check
    _
  $region11: #{encoder_rnn_forward.3} parent=0 // pred_check_branch
    %13 = sbr.rel (0) target = $region13
  $region12: #{encoder_rnn_forward.3} parent=0 // pred_region
    _
  $region13: #{encoder_rnn_forward.3} parent=0 // pred_fallthru
    _
  %v15 = vld [vmem:[%s0] sm:$0xf]
  %v16 = vld [vmem:[%s0 + $0x4] sm:$0xf]
  %v17 = vld [vmem:[%s1] sm:$0xf]
  %v18 = vld [vmem:[%s1 + $0x4] sm:$0xf]
  %v19 = vld [vmem:[%s2] sm:$0x1]
  %v21 = vperm.slane %v19, 0
  %v25 = vunpack.c.l.b16 %v15
  %v26 = vunpack.c.l.b16 %v16
  %v27 = vpack.c.b16 %v26, %v25
  %v30 = vunpack.c.l.b16 %v17
  %v31 = vunpack.c.l.b16 %v18
  %v32 = vpack.c.b16 %v31, %v30
  %vm34 = vcmask 130048
  %v36 = vsel %vm34, %v27, 0
  %38 = vmatpush.bf16.msra.mxu0 0
  %39 = vmatpush.bf16.msra.mxu0 0
  %40 = vmatpush.bf16.msra.mxu0 0
  %41 = vmatpush.bf16.msra.mxu0 0
  %42 = vmatpush.bf16.msra.mxu0 0
  %43 = vmatpush.bf16.msra.mxu0 0
  %44 = vmatpush.bf16.msra.mxu0 0
  %45 = vmatpush.bf16.msra.mxu0 %v32
  %46 = vmatmul.bf16.gmra.mxu0 %v36
  %v47 = vpop.f32.mrf.mxu0
  %v48 = vadd.f32 %v21, %v47
  %v49 = vpop.f32.mrf.mxu0
  %v50 = vadd.f32 %v21, %v49
  %51 = vdwg.mxu0
  %v52 = vpack.c.bf16 %v48, %v48
  %v53 = vpack.c.bf16 %v50, %v50
  %vm54 = vcmask 781312
  %55 = vst.msk [vmem:[%s3] sm:$0xf] %vm54, %v52
  %56 = vst.msk [vmem:[%s3 + $0x4] sm:$0xf] %vm54, %v53
  // Predicated region
  $region14: #{encoder_rnn_forward.3} parent=0 // pred_check
    _
  $region15: #{encoder_rnn_forward.3} parent=0 // pred_check_branch
    %58 = sbr.rel (0) target = $region17
  $region16: #{encoder_rnn_forward.3} parent=0 // pred_region
    _
  $region17: #{encoder_rnn_forward.3} parent=0 // pred_fallthru
    _
  // Predicated region
  $region18: #{encoder_rnn_forward.3} parent=0 // pred_check
    _
  $region19: #{encoder_rnn_forward.3} parent=0 // pred_check_branch
    %60 = sbr.rel (0) target = $region21
  $region20: #{encoder_rnn_forward.3} parent=0 // pred_region
    _
  $region21: #{encoder_rnn_forward.3} parent=0 // pred_fallthru
    _

// kernel: encoder_rnn_forward.4
$region0: #{encoder_rnn_forward.4}
  #allocation0 [shape = 'u32[]', space=smem, size = 0x4, offset = 0x4, fixed_abs, tag = 'smem constant byte address 0x4 - core index']
  #allocation1 [shape = 'u32[72,128]{1,0:T(1,128)}', space=vmem, size = 0x9000, scoped, tag = 'internal scratch']
  #allocation2 [shape = 'f32[2,32]{1,0:T(2,128)}', space=vmem, size = 0x400, scoped, tag = 'scratch operand']
  %s0 = inlined_call_operand.vmem [shape: bf16[8,2,96], index: 0, kind: input, shape index: {}]
  %s1 = inlined_call_operand.vmem [shape: f32[32,96], index: 1, kind: input, shape index: {}]
  %s2 = inlined_call_operand.vmem [shape: f32[1,96], index: 2, kind: input, shape index: {}]
  %s3 = inlined_call_operand.vmem [shape: bf16[32,16], index: 3, kind: input, shape index: {}]
  %s4 = inlined_call_operand.vmem [shape: f32[1,16], index: 4, kind: input, shape index: {}]
  %s5 = inlined_call_operand.hbm [shape: f32[8,2,16], index: 5, kind: output, shape index: {0}]
  %s6 = inlined_call_operand.vmem [shape: f32[2,32], index: 6, kind: output, shape index: {1}]
  %7 = xla_tuple %s5, %s6
  %s8 = sld [smem:[#allocation0]]
  $region42: #{encoder_rnn_forward.4} parent=0
    _
  %s10 = ssub.s32 1, %s8
  %s11 = scalar_select 0, %s10, %s8
  $region1: #{encoder_rnn_forward.4} parent=0
    #allocation3 [shape = 'u8[8192]{0}', space=vmem, size = 0x2000, scoped, tag = 'output window, operand 0, single buffered']
    #allocation4 [shape = 's32[1]{0}', space=sflag, size = 0x4, scoped, tag = 'scoped memory for encoder_rnn_forward.4']
    %12 = vsyncpa [#allocation4], 0
    // Predicated region
    $region2: #{encoder_rnn_forward.4} parent=1 // pred_check
      _
    $region3: #{encoder_rnn_forward.4} parent=1 // pred_check_branch
      %14 = sbr.rel (0) target = $region5
    $region4: #{encoder_rnn_forward.4} parent=1 // pred_region
      _
    $region5: #{encoder_rnn_forward.4} parent=1 // pred_fallthru
      _
    // Predicated region
    $region6: #{encoder_rnn_forward.4} parent=1 // pred_check
      _
    $region7: #{encoder_rnn_forward.4} parent=1 // pred_check_branch
      %16 = sbr.rel (0) target = $region9
    $region8: #{encoder_rnn_forward.4} parent=1 // pred_region
      _
    $region9: #{encoder_rnn_forward.4} parent=1 // pred_fallthru
      _
    // Predicated region
    $region10: #{encoder_rnn_forward.4} parent=1 // pred_check
      _
    $region11: #{encoder_rnn_forward.4} parent=1 // pred_check_branch
      %18 = sbr.rel (0) target = $region13
    $region12: #{encoder_rnn_forward.4} parent=1 // pred_region
      _
    $region13: #{encoder_rnn_forward.4} parent=1 // pred_fallthru
      _
    // Predicated region
    $region14: #{encoder_rnn_forward.4} parent=1 // pred_check
      _
    $region15: #{encoder_rnn_forward.4} parent=1 // pred_check_branch
      %20 = sbr.rel (0) target = $region17
    $region16: #{encoder_rnn_forward.4} parent=1 // pred_region
      _
    $region17: #{encoder_rnn_forward.4} parent=1 // pred_fallthru
      _
    // Predicated region
    $region18: #{encoder_rnn_forward.4} parent=1 // pred_check
      _
    $region19: #{encoder_rnn_forward.4} parent=1 // pred_check_branch
      %22 = sbr.rel (0) target = $region21
    $region20: #{encoder_rnn_forward.4} parent=1 // pred_region
      _
    $region21: #{encoder_rnn_forward.4} parent=1 // pred_fallthru
      _
    %p24 = scmp.eq.s32.totalorder 0, 0
    // Predicated region
    $region22: #{encoder_rnn_forward.4} parent=1 // pred_check
      %p25 = pneg %p24
    $region23: #{encoder_rnn_forward.4} parent=1 // pred_check_branch
      %27 = sbr.rel (%p25) target = $region25
    $region24: #{encoder_rnn_forward.4} parent=1 // pred_region
      %vm28 = vcmask 254976
      %29 = vst.msk [vmem:[#allocation2] sm:$0x3] %vm28, 0.0
    $region25: #{encoder_rnn_forward.4} parent=1 // pred_fallthru
      _
    %v30 = vld [vmem:[%s1] sm:$0xff]
    %v31 = vld [vmem:[%s1 + $0x8] sm:$0xff]
    %v32 = vld [vmem:[%s1 + $0x10] sm:$0xff]
    %v33 = vld [vmem:[%s1 + $0x18] sm:$0xff]
    %v34 = vld [vmem:[%s3] sm:$0xf]
    %v35 = vld [vmem:[%s3 + $0x4] sm:$0xf]
    %v36 = vld [vmem:[%s3 + $0x8] sm:$0xf]
    %v37 = vld [vmem:[%s3 + $0xc] sm:$0xf]
    %v38 = vld [vmem:[%s2] sm:$0x1]
    %v40 = vperm.slane %v38, 0
    %v42 = vld [vmem:[%s4] sm:$0x1]
    %v44 = vperm.slane %v42, 0
    %v46 = vld [vmem:[#allocation2] sm:$0x3]
    %v47 = vld [vmem:[%s0] sm:$0x1]
    %v48 = vunpack.c.l.bf16 %v47
    %vm49 = vcmask 261120
    %v51 = vsel %vm49, %v46, 0
    %53 = vmatpush.msra.mxu0 0.0
    %54 = vmatpush.msra.mxu0 0.0
    %55 = vmatpush.msra.mxu0 0.0
    %56 = vmatpush.msra.mxu0 0.0
    %57 = vmatpush.msra.mxu0 0.0
    %58 = vmatpush.msra.mxu0 0.0
    %59 = vmatpush.msra.mxu0 0.0
    %60 = vmatpush.msra.mxu0 0.0
    %61 = vmatpush.msra.mxu0 0.0
    %62 = vmatpush.msra.mxu0 0.0
    %63 = vmatpush.msra.mxu0 0.0
    %64 = vmatpush.msra.mxu0 0.0
    %65 = vmatpush.msra.mxu0 %v33
    %66 = vmatpush.msra.mxu0 %v32
    %67 = vmatpush.msra.mxu0 %v31
    %68 = vmatpush.msra.mxu0 %v30
    %69 = vmatmul.f32.gmra.mxu0 %v51
    %v70 = vpop.f32.mrf.mxu0
    %v71 = vadd.f32 %v40, %v70
    %72 = vdwg.mxu0
    %v73 = vadd.f32 %v48, %v71
    %v74 = vxor.u32 %v73, 2147483648
    %v75 = vmul.f32 %v74, 1.442695
    %v76 = vpow.pop %v75
    %v77 = vadd.f32 %v76, 1.0
    %v78 = vrcp.pop %v77
    %v79 = vmul.f32 %v77, %v78
    %v80 = vsub.f32 1.0, %v79
    %v81 = vmul.f32 %v78, %v80
    %v82 = vadd.f32 %v78, %v81
    %vm83 = vweird.f32 %v77
    %vm84 = vweird.f32 %v78
    %vm85 = vmor %vm83, %vm84
    %v86 = vsel %vm85, %v78, %v82
    %v87 = vand.u32 2147483647, %v77
    %vm88 = vcmp.eq.f32.partialorder %v87, 8.507059e+37
    %v89 = vand.u32 %v77, 2147483648
    %v90 = vor.u32 1.1754944e-38, %v89
    %v91 = vsel %vm88, %v90, %v86
    %v92 = vmul.f32 1.0, %v91
    %94 = vrot.lane.b32.xlu0 %v71, 64
    %v95 = vpop.permute.xlu0 %94
    %v97 = vmul.f32 %v92, %v95
    %99 = vrot.lane.b32.xlu0 %v97, 64
    %v100 = vpop.permute.xlu0 %99
    %v102 = vadd.f32 %v48, %v100
    %v103 = vtanh.pop %v102
    %105 = vst [vmem:[#allocation1] ss:$4 sm:$0xff] %v103
    %v106 = vld.sshfl [vmem:[#allocation1] sm:$0xff pattern:$0x73625140]
    %107 = vrot.lane.b32.xlu0 %v106, 64
    %v108 = vpop.permute.xlu0 %107
    %v110 = vsub.f32 %v46, %v108
    %112 = vrot.lane.b32.xlu0 %v110, 32
    %v113 = vpop.permute.xlu0 %112
    %v115 = vmul.f32 %v92, %v113
    %117 = vrot.lane.b32.xlu0 %v115, 32
    %v118 = vpop.permute.xlu0 %117
    %v120 = vadd.f32 %v103, %v118
    %v121 = vpack.c.bf16 %v120, %v120
    %123 = vrot.lane.b32.xlu0 %v121, 64
    %v124 = vpop.permute.xlu0 %123
    %v129 = vunpack.c.l.b16 %v34
    %v130 = vunpack.c.l.b16 %v35
    %v131 = vunpack.c.l.b16 %v36
    %v132 = vunpack.c.l.b16 %v37
    %v133 = vpack.c.b16 %v130, %v129
    %v134 = vpack.c.b16 %v132, %v131
    %v138 = vsel %vm49, %v124, 0
    %140 = vmatpush.bf16.msra.mxu0 0
    %141 = vmatpush.bf16.msra.mxu0 0
    %142 = vmatpush.bf16.msra.mxu0 0
    %143 = vmatpush.bf16.msra.mxu0 0
    %144 = vmatpush.bf16.msra.mxu0 0
    %145 = vmatpush.bf16.msra.mxu0 0
    %146 = vmatpush.bf16.msra.mxu0 %v134
    %147 = vmatpush.bf16.msra.mxu0 %v133
    %148 = vmatmul.bf16.gmra.mxu0 %v138
    %v149 = vpop.f32.mrf.mxu0
    %v150 = vadd.f32 %v44, %v149
    %v151 = vpop.f32.mrf.mxu0
    %152 = vdwg.mxu0
    %vm153 = vcmask 123904
    %154 = vst.msk [vmem:[#allocation3] sm:$0x3] %vm153, %v150
    %s155 = scalar_lea.vmem %s0, 1
    %v156 = vld [vmem:[%s155] sm:$0x1]
    %v157 = vunpack.c.l.bf16 %v156
    %159 = vst [vmem:[#allocation1] ss:$4 sm:$0xff] %v120
    %v160 = vld.sshfl [vmem:[#allocation1] sm:$0xff pattern:$0x73625140]
    %161 = vrot.lane.b32.xlu0 %v160, 64
    %v162 = vpop.permute.xlu0 %161
    %v163 = vsel %vm49, %v162, 0
    %165 = vmatpush.msra.mxu0 0.0
    %166 = vmatpush.msra.mxu0 0.0
    %167 = vmatpush.msra.mxu0 0.0
    %168 = vmatpush.msra.mxu0 0.0
    %169 = vmatpush.msra.mxu0 0.0
    %170 = vmatpush.msra.mxu0 0.0
    %171 = vmatpush.msra.mxu0 0.0
    %172 = vmatpush.msra.mxu0 0.0
    %173 = vmatpush.msra.mxu0 0.0
    %174 = vmatpush.msra.mxu0 0.0
    %175 = vmatpush.msra.mxu0 0.0
    %176 = vmatpush.msra.mxu0 0.0
    %177 = vmatpush.msra.mxu0 %v33
    %178 = vmatpush.msra.mxu0 %v32
    %179 = vmatpush.msra.mxu0 %v31
    %180 = vmatpush.msra.mxu0 %v30
    %181 = vmatmul.f32.gmra.mxu0 %v163
    %v182 = vpop.f32.mrf.mxu0
    %v183 = vadd.f32 %v40, %v182
    %184 = vdwg.mxu0
    %v185 = vadd.f32 %v157, %v183
    %v186 = vxor.u32 %v185, 2147483648
    %v187 = vmul.f32 %v186, 1.442695
    %v188 = vpow.pop %v187
    %v189 = vadd.f32 %v188, 1.0
    %v190 = vrcp.pop %v189
    %v191 = vmul.f32 %v189, %v190
    %v192 = vsub.f32 1.0, %v191
    %v193 = vmul.f32 %v190, %v192
    %v194 = vadd.f32 %v190, %v193
    %vm195 = vweird.f32 %v189
    %vm196 = vweird.f32 %v190
    %vm197 = vmor %vm195, %vm196
    %v198 = vsel %vm197, %v190, %v194
    %v199 = vand.u32 2147483647, %v189
    %vm200 = vcmp.eq.f32.partialorder %v199, 8.507059e+37
    %v201 = vand.u32 %v189, 2147483648
    %v202 = vor.u32 1.1754944e-38, %v201
    %v203 = vsel %vm200, %v202, %v198
    %v204 = vmul.f32 1.0, %v203
    %206 = vrot.lane.b32.xlu0 %v183, 64
    %v207 = vpop.permute.xlu0 %206
    %v209 = vmul.f32 %v204, %v207
    %211 = vrot.lane.b32.xlu0 %v209, 64
    %v212 = vpop.permute.xlu0 %211
    %v214 = vadd.f32 %v157, %v212
    %v215 = vtanh.pop %v214
    %v216 = vsub.f32 %v120, %v215
    %218 = vrot.lane.b32.xlu0 %v216, 96
    %v219 = vpop.permute.xlu0 %218
    %v221 = vmul.f32 %v204, %v219
    %223 = vrot.lane.b32.xlu0 %v221, 32
    %v224 = vpop.permute.xlu0 %223
    %v226 = vadd.f32 %v215, %v224
    %v227 = vpack.c.bf16 %v226, %v226
    %229 = vrot.lane.b32.xlu0 %v227, 64
    %v230 = vpop.permute.xlu0 %229
    %v232 = vsel %vm49, %v230, 0
    %234 = vmatpush.bf16.msra.mxu0 0
    %235 = vmatpush.bf16.msra.mxu0 0
    %236 = vmatpush.bf16.msra.mxu0 0
    %237 = vmatpush.bf16.msra.mxu0 0
    %238 = vmatpush.bf16.msra.mxu0 0
    %239 = vmatpush.bf16.msra.mxu0 0
    %240 = vmatpush.bf16.msra.mxu0 %v134
    %241 = vmatpush.bf16.msra.mxu0 %v133
    %242 = vmatmul.bf16.gmra.mxu0 %v232
    %v243 = vpop.f32.mrf.mxu0
    %v244 = vadd.f32 %v44, %v243
    %v245 = vpop.f32.mrf.mxu0
    %246 = vdwg.mxu0
    %s247 = scalar_lea.vmem [#allocation3], 2
    %248 = vst.msk [vmem:[%s247] sm:$0x3] %vm153, %v244
    %s249 = scalar_lea.vmem %s0, 2
    %v250 = vld [vmem:[%s249] sm:$0x1]
    %v251 = vunpack.c.l.bf16 %v250
    %253 = vst [vmem:[#allocation1] ss:$4 sm:$0xff] %v226
    %v254 = vld.sshfl [vmem:[#allocation1] sm:$0xff pattern:$0x73625140]
    %255 = vrot.lane.b32.xlu0 %v254, 64
    %v256 = vpop.permute.xlu0 %255
    %v257 = vsel %vm49, %v256, 0
    %259 = vmatpush.msra.mxu0 0.0
    %260 = vmatpush.msra.mxu0 0.0
    %261 = vmatpush.msra.mxu0 0.0
    %262 = vmatpush.msra.mxu0 0.0
    %263 = vmatpush.msra.mxu0 0.0
    %264 = vmatpush.msra.mxu0 0.0
    %265 = vmatpush.msra.mxu0 0.0
    %266 = vmatpush.msra.mxu0 0.0
    %267 = vmatpush.msra.mxu0 0.0
    %268 = vmatpush.msra.mxu0 0.0
    %269 = vmatpush.msra.mxu0 0.0
    %270 = vmatpush.msra.mxu0 0.0
    %271 = vmatpush.msra.mxu0 %v33
    %272 = vmatpush.msra.mxu0 %v32
    %273 = vmatpush.msra.mxu0 %v31
    %274 = vmatpush.msra.mxu0 %v30
    %275 = vmatmul.f32.gmra.mxu0 %v257
    %v276 = vpop.f32.mrf.mxu0
    %v277 = vadd.f32 %v40, %v276
    %278 = vdwg.mxu0
    %v279 = vadd.f32 %v251, %v277
    %v280 = vxor.u32 %v279, 2147483648
    %v281 = vmul.f32 %v280, 1.442695
    %v282 = vpow.pop %v281
    %v283 = vadd.f32 %v282, 1.0
    %v284 = vrcp.pop %v283
    %v285 = vmul.f32 %v283, %v284
    %v286 = vsub.f32 1.0, %v285
    %v287 = vmul.f32 %v284, %v286
    %v288 = vadd.f32 %v284, %v287
    %vm289 = vweird.f32 %v283
    %vm290 = vweird.f32 %v284
    %vm291 = vmor %vm289, %vm290
    %v292 = vsel %vm291, %v284, %v288
    %v293 = vand.u32 2147483647, %v283
    %vm294 = vcmp.eq.f32.partialorder %v293, 8.507059e+37
    %v295 = vand.u32 %v283, 2147483648
    %v296 = vor.u32 1.1754944e-38, %v295
    %v297 = vsel %vm294, %v296, %v292
    %v298 = vmul.f32 1.0, %v297
    %300 = vrot.lane.b32.xlu0 %v277, 64
    %v301 = vpop.permute.xlu0 %300
    %v303 = vmul.f32 %v298, %v301
    %305 = vrot.lane.b32.xlu0 %v303, 64
    %v306 = vpop.permute.xlu0 %305
    %v308 = vadd.f32 %v251, %v306
    %v309 = vtanh.pop %v308
    %v310 = vsub.f32 %v226, %v309
    %312 = vrot.lane.b32.xlu0 %v310, 96
    %v313 = vpop.permute.xlu0 %312
    %v315 = vmul.f32 %v298, %v313
    %317 = vrot.lane.b32.xlu0 %v315, 32
    %v318 = vpop.permute.xlu0 %317
    %v320 = vadd.f32 %v309, %v318
    %v321 = vpack.c.bf16 %v320, %v320
    %323 = vrot.lane.b32.xlu0 %v321, 64
    %v324 = vpop.permute.xlu0 %323
    %v326 = vsel %vm49, %v324, 0
    %328 = vmatpush.bf16.msra.mxu0 0
    %329 = vmatpush.bf16.msra.mxu0 0
    %330 = vmatpush.bf16.msra.mxu0 0
    %331 = vmatpush.bf16.msra.mxu0 0
    %332 = vmatpush.bf16.msra.mxu0 0
    %333 = vmatpush.bf16.msra.mxu0 0
    %334 = vmatpush.bf16.msra.mxu0 %v134
    %335 = vmatpush.bf16.msra.mxu0 %v133
    %336 = vmatmul.bf16.gmra.mxu0 %v326
    %v337 = vpop.f32.mrf.mxu0
    %v338 = vadd.f32 %v44, %v337
    %v339 = vpop.f32.mrf.mxu0
    %340 = vdwg.mxu0
    %s341 = scalar_lea.vmem [#allocation3], 4
    %342 = vst.msk [vmem:[%s341] sm:$0x3] %vm153, %v338
    %s343 = scalar_lea.vmem %s0, 3
    %v344 = vld [vmem:[%s343] sm:$0x1]
    %v345 = vunpack.c.l.bf16 %v344
    %347 = vst [vmem:[#allocation1] ss:$4 sm:$0xff] %v320
    %v348 = vld.sshfl [vmem:[#allocation1] sm:$0xff pattern:$0x73625140]
    %349 = vrot.lane.b32.xlu0 %v348, 64
    %v350 = vpop.permute.xlu0 %349
    %v351 = vsel %vm49, %v350, 0
    %353 = vmatpush.msra.mxu0 0.0
    %354 = vmatpush.msra.mxu0 0.0
    %355 = vmatpush.msra.mxu0 0.0
    %356 = vmatpush.msra.mxu0 0.0
    %357 = vmatpush.msra.mxu0 0.0
    %358 = vmatpush.msra.mxu0 0.0
    %359 = vmatpush.msra.mxu0 0.0
    %360 = vmatpush.msra.mxu0 0.0
    %361 = vmatpush.msra.mxu0 0.0
    %362 = vmatpush.msra.mxu0 0.0
    %363 = vmatpush.msra.mxu0 0.0
    %364 = vmatpush.msra.mxu0 0.0
    %365 = vmatpush.msra.mxu0 %v33
    %366 = vmatpush.msra.mxu0 %v32
    %367 = vmatpush.msra.mxu0 %v31
    %368 = vmatpush.msra.mxu0 %v30
    %369 = vmatmul.f32.gmra.mxu0 %v351
    %v370 = vpop.f32.mrf.mxu0
    %v371 = vadd.f32 %v40, %v370
    %372 = vdwg.mxu0
    %v373 = vadd.f32 %v345, %v371
    %v374 = vxor.u32 %v373, 2147483648
    %v375 = vmul.f32 %v374, 1.442695
    %v376 = vpow.pop %v375
    %v377 = vadd.f32 %v376, 1.0
    %v378 = vrcp.pop %v377
    %v379 = vmul.f32 %v377, %v378
    %v380 = vsub.f32 1.0, %v379
    %v381 = vmul.f32 %v378, %v380
    %v382 = vadd.f32 %v378, %v381
    %vm383 = vweird.f32 %v377
    %vm384 = vweird.f32 %v378
    %vm385 = vmor %vm383, %vm384
    %v386 = vsel %vm385, %v378, %v382
    %v387 = vand.u32 2147483647, %v377
    %vm388 = vcmp.eq.f32.partialorder %v387, 8.507059e+37
    %v389 = vand.u32 %v377, 2147483648
    %v390 = vor.u32 1.1754944e-38, %v389
    %v391 = vsel %vm388, %v390, %v386
    %v392 = vmul.f32 1.0, %v391
    %394 = vrot.lane.b32.xlu0 %v371, 64
    %v395 = vpop.permute.xlu0 %394
    %v397 = vmul.f32 %v392, %v395
    %399 = vrot.lane.b32.xlu0 %v397, 64
    %v400 = vpop.permute.xlu0 %399
    %v402 = vadd.f32 %v345, %v400
    %v403 = vtanh.pop %v402
    %v404 = vsub.f32 %v320, %v403
    %406 = vrot.lane.b32.xlu0 %v404, 96
    %v407 = vpop.permute.xlu0 %406
    %v409 = vmul.f32 %v392, %v407
    %411 = vrot.lane.b32.xlu0 %v409, 32
    %v412 = vpop.permute.xlu0 %411
    %v414 = vadd.f32 %v403, %v412
    %v415 = vpack.c.bf16 %v414, %v414
    %417 = vrot.lane.b32.xlu0 %v415, 64
    %v418 = vpop.permute.xlu0 %417
    %v420 = vsel %vm49, %v418, 0
    %422 = vmatpush.bf16.msra.mxu0 0
    %423 = vmatpush.bf16.msra.mxu0 0
    %424 = vmatpush.bf16.msra.mxu0 0
    %425 = vmatpush.bf16.msra.mxu0 0
    %426 = vmatpush.bf16.msra.mxu0 0
    %427 = vmatpush.bf16.msra.mxu0 0
    %428 = vmatpush.bf16.msra.mxu0 %v134
    %429 = vmatpush.bf16.msra.mxu0 %v133
    %430 = vmatmul.bf16.gmra.mxu0 %v420
    %v431 = vpop.f32.mrf.mxu0
    %v432 = vadd.f32 %v44, %v431
    %v433 = vpop.f32.mrf.mxu0
    %434 = vdwg.mxu0
    %s435 = scalar_lea.vmem [#allocation3], 6
    %436 = vst.msk [vmem:[%s435] sm:$0x3] %vm153, %v432
    %s437 = scalar_lea.vmem %s0, 4
    %v438 = vld [vmem:[%s437] sm:$0x1]
    %v439 = vunpack.c.l.bf16 %v438
    %441 = vst [vmem:[#allocation1] ss:$4 sm:$0xff] %v414
    %v442 = vld.sshfl [vmem:[#allocation1] sm:$0xff pattern:$0x73625140]
    %443 = vrot.lane.b32.xlu0 %v442, 64
    %v444 = vpop.permute.xlu0 %443
    %v445 = vsel %vm49, %v444, 0
    %447 = vmatpush.msra.mxu0 0.0
    %448 = vmatpush.msra.mxu0 0.0
    %449 = vmatpush.msra.mxu0 0.0
    %450 = vmatpush.msra.mxu0 0.0
    %451 = vmatpush.msra.mxu0 0.0
    %452 = vmatpush.msra.mxu0 0.0
    %453 = vmatpush.msra.mxu0 0.0
    %454 = vmatpush.msra.mxu0 0.0
    %455 = vmatpush.msra.mxu0 0.0
    %456 = vmatpush.msra.mxu0 0.0
    %457 = vmatpush.msra.mxu0 0.0
    %458 = vmatpush.msra.mxu0 0.0
    %459 = vmatpush.msra.mxu0 %v33
    %460 = vmatpush.msra.mxu0 %v32
    %461 = vmatpush.msra.mxu0 %v31
    %462 = vmatpush.msra.mxu0 %v30
    %463 = vmatmul.f32.gmra.mxu0 %v445
    %v464 = vpop.f32.mrf.mxu0
    %v465 = vadd.f32 %v40, %v464
    %466 = vdwg.mxu0
    %v467 = vadd.f32 %v439, %v465
    %v468 = vxor.u32 %v467, 2147483648
    %v469 = vmul.f32 %v468, 1.442695
    %v470 = vpow.pop %v469
    %v471 = vadd.f32 %v470, 1.0
    %v472 = vrcp.pop %v471
    %v473 = vmul.f32 %v471, %v472
    %v474 = vsub.f32 1.0, %v473
    %v475 = vmul.f32 %v472, %v474
    %v476 = vadd.f32 %v472, %v475
    %vm477 = vweird.f32 %v471
    %vm478 = vweird.f32 %v472
    %vm479 = vmor %vm477, %vm478
    %v480 = vsel %vm479, %v472, %v476
    %v481 = vand.u32 2147483647, %v471
    %vm482 = vcmp.eq.f32.partialorder %v481, 8.507059e+37
    %v483 = vand.u32 %v471, 2147483648
    %v484 = vor.u32 1.1754944e-38, %v483
    %v485 = vsel %vm482, %v484, %v480
    %v486 = vmul.f32 1.0, %v485
    %488 = vrot.lane.b32.xlu0 %v465, 64
    %v489 = vpop.permute.xlu0 %488
    %v491 = vmul.f32 %v486, %v489
    %493 = vrot.lane.b32.xlu0 %v491, 64
    %v494 = vpop.permute.xlu0 %493
    %v496 = vadd.f32 %v439, %v494
    %v497 = vtanh.pop %v496
    %v498 = vsub.f32 %v414, %v497
    %500 = vrot.lane.b32.xlu0 %v498, 96
    %v501 = vpop.permute.xlu0 %500
    %v503 = vmul.f32 %v486, %v501
    %505 = vrot.lane.b32.xlu0 %v503, 32
    %v506 = vpop.permute.xlu0 %505
    %v508 = vadd.f32 %v497, %v506
    %v509 = vpack.c.bf16 %v508, %v508
    %511 = vrot.lane.b32.xlu0 %v509, 64
    %v512 = vpop.permute.xlu0 %511
    %v514 = vsel %vm49, %v512, 0
    %516 = vmatpush.bf16.msra.mxu0 0
    %517 = vmatpush.bf16.msra.mxu0 0
    %518 = vmatpush.bf16.msra.mxu0 0
    %519 = vmatpush.bf16.msra.mxu0 0
    %520 = vmatpush.bf16.msra.mxu0 0
    %521 = vmatpush.bf16.msra.mxu0 0
    %522 = vmatpush.bf16.msra.mxu0 %v134
    %523 = vmatpush.bf16.msra.mxu0 %v133
    %524 = vmatmul.bf16.gmra.mxu0 %v514
    %v525 = vpop.f32.mrf.mxu0
    %v526 = vadd.f32 %v44, %v525
    %v527 = vpop.f32.mrf.mxu0
    %528 = vdwg.mxu0
    %s529 = scalar_lea.vmem [#allocation3], 8
    %530 = vst.msk [vmem:[%s529] sm:$0x3] %vm153, %v526
    %s531 = scalar_lea.vmem %s0, 5
    %v532 = vld [vmem:[%s531] sm:$0x1]
    %v533 = vunpack.c.l.bf16 %v532
    %535 = vst [vmem:[#allocation1] ss:$4 sm:$0xff] %v508
    %v536 = vld.sshfl [vmem:[#allocation1] sm:$0xff pattern:$0x73625140]
    %537 = vrot.lane.b32.xlu0 %v536, 64
    %v538 = vpop.permute.xlu0 %537
    %v539 = vsel %vm49, %v538, 0
    %541 = vmatpush.msra.mxu0 0.0
    %542 = vmatpush.msra.mxu0 0.0
    %543 = vmatpush.msra.mxu0 0.0
    %544 = vmatpush.msra.mxu0 0.0
    %545 = vmatpush.msra.mxu0 0.0
    %546 = vmatpush.msra.mxu0 0.0
    %547 = vmatpush.msra.mxu0 0.0
    %548 = vmatpush.msra.mxu0 0.0
    %549 = vmatpush.msra.mxu0 0.0
    %550 = vmatpush.msra.mxu0 0.0
    %551 = vmatpush.msra.mxu0 0.0
    %552 = vmatpush.msra.mxu0 0.0
    %553 = vmatpush.msra.mxu0 %v33
    %554 = vmatpush.msra.mxu0 %v32
    %555 = vmatpush.msra.mxu0 %v31
    %556 = vmatpush.msra.mxu0 %v30
    %557 = vmatmul.f32.gmra.mxu0 %v539
    %v558 = vpop.f32.mrf.mxu0
    %v559 = vadd.f32 %v40, %v558
    %560 = vdwg.mxu0
    %v561 = vadd.f32 %v533, %v559
    %v562 = vxor.u32 %v561, 2147483648
    %v563 = vmul.f32 %v562, 1.442695
    %v564 = vpow.pop %v563
    %v565 = vadd.f32 %v564, 1.0
    %v566 = vrcp.pop %v565
    %v567 = vmul.f32 %v565, %v566
    %v568 = vsub.f32 1.0, %v567
    %v569 = vmul.f32 %v566, %v568
    %v570 = vadd.f32 %v566, %v569
    %vm571 = vweird.f32 %v565
    %vm572 = vweird.f32 %v566
    %vm573 = vmor %vm571, %vm572
    %v574 = vsel %vm573, %v566, %v570
    %v575 = vand.u32 2147483647, %v565
    %vm576 = vcmp.eq.f32.partialorder %v575, 8.507059e+37
    %v577 = vand.u32 %v565, 2147483648
    %v578 = vor.u32 1.1754944e-38, %v577
    %v579 = vsel %vm576, %v578, %v574
    %v580 = vmul.f32 1.0, %v579
    %582 = vrot.lane.b32.xlu0 %v559, 64
    %v583 = vpop.permute.xlu0 %582
    %v585 = vmul.f32 %v580, %v583
    %587 = vrot.lane.b32.xlu0 %v585, 64
    %v588 = vpop.permute.xlu0 %587
    %v590 = vadd.f32 %v533, %v588
    %v591 = vtanh.pop %v590
    %v592 = vsub.f32 %v508, %v591
    %594 = vrot.lane.b32.xlu0 %v592, 96
    %v595 = vpop.permute.xlu0 %594
    %v597 = vmul.f32 %v580, %v595
    %599 = vrot.lane.b32.xlu0 %v597, 32
    %v600 = vpop.permute.xlu0 %599
    %v602 = vadd.f32 %v591, %v600
    %v603 = vpack.c.bf16 %v602, %v602
    %605 = vrot.lane.b32.xlu0 %v603, 64
    %v606 = vpop.permute.xlu0 %605
    %v608 = vsel %vm49, %v606, 0
    %610 = vmatpush.bf16.msra.mxu0 0
    %611 = vmatpush.bf16.msra.mxu0 0
    %612 = vmatpush.bf16.msra.mxu0 0
    %613 = vmatpush.bf16.msra.mxu0 0
    %614 = vmatpush.bf16.msra.mxu0 0
    %615 = vmatpush.bf16.msra.mxu0 0
    %616 = vmatpush.bf16.msra.mxu0 %v134
    %617 = vmatpush.bf16.msra.mxu0 %v133
    %618 = vmatmul.bf16.gmra.mxu0 %v608
    %v619 = vpop.f32.mrf.mxu0
    %v620 = vadd.f32 %v44, %v619
    %v621 = vpop.f32.mrf.mxu0
    %622 = vdwg.mxu0
    %s623 = scalar_lea.vmem [#allocation3], 10
    %624 = vst.msk [vmem:[%s623] sm:$0x3] %vm153, %v620
    %s625 = scalar_lea.vmem %s0, 6
    %v626 = vld [vmem:[%s625] sm:$0x1]
    %v627 = vunpack.c.l.bf16 %v626
    %629 = vst [vmem:[#allocation1] ss:$4 sm:$0xff] %v602
    %v630 = vld.sshfl [vmem:[#allocation1] sm:$0xff pattern:$0x73625140]
    %631 = vrot.lane.b32.xlu0 %v630, 64
    %v632 = vpop.permute.xlu0 %631
    %v633 = vsel %vm49, %v632, 0
    %635 = vmatpush.msra.mxu0 0.0
    %636 = vmatpush.msra.mxu0 0.0
    %637 = vmatpush.msra.mxu0 0.0
    %638 = vmatpush.msra.mxu0 0.0
    %639 = vmatpush.msra.mxu0 0.0
    %640 = vmatpush.msra.mxu0 0.0
    %641 = vmatpush.msra.mxu0 0.0
    %642 = vmatpush.msra.mxu0 0.0
    %643 = vmatpush.msra.mxu0 0.0
    %644 = vmatpush.msra.mxu0 0.0
    %645 = vmatpush.msra.mxu0 0.0
    %646 = vmatpush.msra.mxu0 0.0
    %647 = vmatpush.msra.mxu0 %v33
    %648 = vmatpush.msra.mxu0 %v32
    %649 = vmatpush.msra.mxu0 %v31
    %650 = vmatpush.msra.mxu0 %v30
    %651 = vmatmul.f32.gmra.mxu0 %v633
    %v652 = vpop.f32.mrf.mxu0
    %v653 = vadd.f32 %v40, %v652
    %654 = vdwg.mxu0
    %v655 = vadd.f32 %v627, %v653
    %v656 = vxor.u32 %v655, 2147483648
    %v657 = vmul.f32 %v656, 1.442695
    %v658 = vpow.pop %v657
    %v659 = vadd.f32 %v658, 1.0
    %v660 = vrcp.pop %v659
    %v661 = vmul.f32 %v659, %v660
    %v662 = vsub.f32 1.0, %v661
    %v663 = vmul.f32 %v660, %v662
    %v664 = vadd.f32 %v660, %v663
    %vm665 = vweird.f32 %v659
    %vm666 = vweird.f32 %v660
    %vm667 = vmor %vm665, %vm666
    %v668 = vsel %vm667, %v660, %v664
    %v669 = vand.u32 2147483647, %v659
    %vm670 = vcmp.eq.f32.partialorder %v669, 8.507059e+37
    %v671 = vand.u32 %v659, 2147483648
    %v672 = vor.u32 1.1754944e-38, %v671
    %v673 = vsel %vm670, %v672, %v668
    %v674 = vmul.f32 1.0, %v673
    %676 = vrot.lane.b32.xlu0 %v653, 64
    %v677 = vpop.permute.xlu0 %676
    %v679 = vmul.f32 %v674, %v677
    %681 = vrot.lane.b32.xlu0 %v679, 64
    %v682 = vpop.permute.xlu0 %681
    %v684 = vadd.f32 %v627, %v682
    %v685 = vtanh.pop %v684
    %v686 = vsub.f32 %v602, %v685
    %688 = vrot.lane.b32.xlu0 %v686, 96
    %v689 = vpop.permute.xlu0 %688
    %v691 = vmul.f32 %v674, %v689
    %693 = vrot.lane.b32.xlu0 %v691, 32
    %v694 = vpop.permute.xlu0 %693
    %v696 = vadd.f32 %v685, %v694
    %v697 = vpack.c.bf16 %v696, %v696
    %699 = vrot.lane.b32.xlu0 %v697, 64
    %v700 = vpop.permute.xlu0 %699
    %v702 = vsel %vm49, %v700, 0
    %704 = vmatpush.bf16.msra.mxu0 0
    %705 = vmatpush.bf16.msra.mxu0 0
    %706 = vmatpush.bf16.msra.mxu0 0
    %707 = vmatpush.bf16.msra.mxu0 0
    %708 = vmatpush.bf16.msra.mxu0 0
    %709 = vmatpush.bf16.msra.mxu0 0
    %710 = vmatpush.bf16.msra.mxu0 %v134
    %711 = vmatpush.bf16.msra.mxu0 %v133
    %712 = vmatmul.bf16.gmra.mxu0 %v702
    %v713 = vpop.f32.mrf.mxu0
    %v714 = vadd.f32 %v44, %v713
    %v715 = vpop.f32.mrf.mxu0
    %716 = vdwg.mxu0
    %s717 = scalar_lea.vmem [#allocation3], 12
    %718 = vst.msk [vmem:[%s717] sm:$0x3] %vm153, %v714
    %s719 = scalar_lea.vmem %s0, 7
    %v720 = vld [vmem:[%s719] sm:$0x1]
    %v721 = vunpack.c.l.bf16 %v720
    %723 = vst [vmem:[#allocation1] ss:$4 sm:$0xff] %v696
    %v724 = vld.sshfl [vmem:[#allocation1] sm:$0xff pattern:$0x73625140]
    %725 = vrot.lane.b32.xlu0 %v724, 64
    %v726 = vpop.permute.xlu0 %725
    %v727 = vsel %vm49, %v726, 0
    %729 = vmatpush.msra.mxu0 0.0
    %730 = vmatpush.msra.mxu0 0.0
    %731 = vmatpush.msra.mxu0 0.0
    %732 = vmatpush.msra.mxu0 0.0
    %733 = vmatpush.msra.mxu0 0.0
    %734 = vmatpush.msra.mxu0 0.0
    %735 = vmatpush.msra.mxu0 0.0
    %736 = vmatpush.msra.mxu0 0.0
    %737 = vmatpush.msra.mxu0 0.0
    %738 = vmatpush.msra.mxu0 0.0
    %739 = vmatpush.msra.mxu0 0.0
    %740 = vmatpush.msra.mxu0 0.0
    %741 = vmatpush.msra.mxu0 %v33
    %742 = vmatpush.msra.mxu0 %v32
    %743 = vmatpush.msra.mxu0 %v31
    %744 = vmatpush.msra.mxu0 %v30
    %745 = vmatmul.f32.gmra.mxu0 %v727
    %v746 = vpop.f32.mrf.mxu0
    %v747 = vadd.f32 %v40, %v746
    %748 = vdwg.mxu0
    %v749 = vadd.f32 %v721, %v747
    %v750 = vxor.u32 %v749, 2147483648
    %v751 = vmul.f32 %v750, 1.442695
    %v752 = vpow.pop %v751
    %v753 = vadd.f32 %v752, 1.0
    %v754 = vrcp.pop %v753
    %v755 = vmul.f32 %v753, %v754
    %v756 = vsub.f32 1.0, %v755
    %v757 = vmul.f32 %v754, %v756
    %v758 = vadd.f32 %v754, %v757
    %vm759 = vweird.f32 %v753
    %vm760 = vweird.f32 %v754
    %vm761 = vmor %vm759, %vm760
    %v762 = vsel %vm761, %v754, %v758
    %v763 = vand.u32 2147483647, %v753
    %vm764 = vcmp.eq.f32.partialorder %v763, 8.507059e+37
    %v765 = vand.u32 %v753, 2147483648
    %v766 = vor.u32 1.1754944e-38, %v765
    %v767 = vsel %vm764, %v766, %v762
    %v768 = vmul.f32 1.0, %v767
    %770 = vrot.lane.b32.xlu0 %v747, 64
    %v771 = vpop.permute.xlu0 %770
    %v773 = vmul.f32 %v768, %v771
    %775 = vrot.lane.b32.xlu0 %v773, 64
    %v776 = vpop.permute.xlu0 %775
    %v778 = vadd.f32 %v721, %v776
    %v779 = vtanh.pop %v778
    %v780 = vsub.f32 %v696, %v779
    %782 = vrot.lane.b32.xlu0 %v780, 96
    %v783 = vpop.permute.xlu0 %782
    %v785 = vmul.f32 %v768, %v783
    %787 = vrot.lane.b32.xlu0 %v785, 32
    %v788 = vpop.permute.xlu0 %787
    %v790 = vadd.f32 %v779, %v788
    %v791 = vpack.c.bf16 %v790, %v790
    %793 = vrot.lane.b32.xlu0 %v791, 64
    %v794 = vpop.permute.xlu0 %793
    %v796 = vsel %vm49, %v794, 0
    %798 = vmatpush.bf16.msra.mxu0 0
    %799 = vmatpush.bf16.msra.mxu0 0
    %800 = vmatpush.bf16.msra.mxu0 0
    %801 = vmatpush.bf16.msra.mxu0 0
    %802 = vmatpush.bf16.msra.mxu0 0
    %803 = vmatpush.bf16.msra.mxu0 0
    %804 = vmatpush.bf16.msra.mxu0 %v134
    %805 = vmatpush.bf16.msra.mxu0 %v133
    %806 = vmatmul.bf16.gmra.mxu0 %v796
    %v807 = vpop.f32.mrf.mxu0
    %v808 = vadd.f32 %v44, %v807
    %v809 = vpop.f32.mrf.mxu0
    %810 = vdwg.mxu0
    %s811 = scalar_lea.vmem [#allocation3], 14
    %812 = vst.msk [vmem:[%s811] sm:$0x3] %vm153, %v808
    %814 = vst [vmem:[#allocation1] ss:$4 sm:$0xff] %v790
    %v815 = vld.sshfl [vmem:[#allocation1] sm:$0xff pattern:$0x73625140]
    %816 = vrot.lane.b32.xlu0 %v815, 64
    %v817 = vpop.permute.xlu0 %816
    %vm819 = vcmask 254976
    %820 = vst.msk [vmem:[#allocation2] sm:$0x3] %vm819, %v817
    %821 = vst [vmem:[#allocation1] ss:$4 sm:$0xff] %v790
    %v822 = vld.sshfl [vmem:[#allocation1] sm:$0xff pattern:$0x73625140]
    %823 = vrot.lane.b32.xlu0 %v822, 64
    %v824 = vpop.permute.xlu0 %823
    %826 = vst.msk [vmem:[%s6] sm:$0x3] %vm819, %v824
    // Predicated region
    $region26: #{encoder_rnn_forward.4} parent=1 // pred_check
      _
    $region27: #{encoder_rnn_forward.4} parent=1 // pred_check_branch
      %828 = sbr.rel (0) target = $region29
    $region28: #{encoder_rnn_forward.4} parent=1 // pred_region
      %830 = vsyncadd [#allocation4], 0
      %s831 = sshll.u32 [#allocation3], 4
      %s832 = int_to_ptr.vmem [resolvable:$true] %s831
      %s833 = sshll.u32 %s5, 4
      %s834 = int_to_ptr.hbm [resolvable:$true] %s833
      %839 = dma.vmem_to_hbm [thread:$0]  %s832, 256, %s834, [#allocation4], 32, 32, 2
    $region29: #{encoder_rnn_forward.4} parent=1 // pred_fallthru
      _
    // Predicated region
    $region30: #{encoder_rnn_forward.4} parent=1 // pred_check
      _
    $region31: #{encoder_rnn_forward.4} parent=1 // pred_check_branch
      %841 = sbr.rel (0) target = $region33
    $region32: #{encoder_rnn_forward.4} parent=1 // pred_region
      _
    $region33: #{encoder_rnn_forward.4} parent=1 // pred_fallthru
      _
    // Predicated region
    $region34: #{encoder_rnn_forward.4} parent=1 // pred_check
      _
    $region35: #{encoder_rnn_forward.4} parent=1 // pred_check_branch
      %843 = sbr.rel (0) target = $region37
    $region36: #{encoder_rnn_forward.4} parent=1 // pred_region
      %845 = dma.done [#allocation4], 256
    $region37: #{encoder_rnn_forward.4} parent=1 // pred_fallthru
      _
    // Predicated region
    $region38: #{encoder_rnn_forward.4} parent=1 // pred_check
      _
    $region39: #{encoder_rnn_forward.4} parent=1 // pred_check_branch
      %847 = sbr.rel (0) target = $region41
    $region40: #{encoder_rnn_forward.4} parent=1 // pred_region
      _
    $region41: #{encoder_rnn_forward.4} parent=1 // pred_fallthru
      _
    %848 = vsyncpa [#allocation4], 1

</llo_original>
